<compile_context>
chip_gen: v5e
topology: v5e:2x2
jax: 0.10.0
libtpu: 0.0.40
codegen_flags: <defaults>
</compile_context>

<pallas_src>
import functools

import jax
import jax.numpy as jnp
from jax import lax
from jax.experimental import pallas as pl
from jax.experimental.pallas import tpu as pltpu


def _lstm_recurrence_kernel(xg_ref, whh_ref, h0_ref, c0_ref,
                            out_ref, hT_ref, cT_ref):
    """Whole LSTM recurrence in a single kernel invocation.

    xg_ref : (T, B, 4H)  precomputed x_t @ W_ih^T + (b_ih + b_hh)
    whh_ref: (H, 4H)     recurrent weight, transposed, resident in VMEM
    h0_ref, c0_ref: (B, H) initial hidden / cell state
    out_ref: (T, B, H)   per-step hidden states
    hT_ref, cT_ref: (B, H) final hidden / cell state
    """
    T = xg_ref.shape[0]
    H = h0_ref.shape[-1]

    whh = whh_ref[...]          # (H, 4H) — loaded once, reused every step
    h = h0_ref[...]             # (B, H)  carried in vregs
    c = c0_ref[...]             # (B, H)  carried in vregs

    # Static Python loop over T (T is a compile-time constant): fully
    # unrolled, no scratch round-trip for the carried state.
    for t in range(T):
        # Only this matmul sits on the serial dependency chain.
        gates = xg_ref[t] + jnp.dot(
            h, whh, preferred_element_type=jnp.float32)          # (B, 4H)

        i_g = jax.nn.sigmoid(gates[:, 0 * H:1 * H])
        f_g = jax.nn.sigmoid(gates[:, 1 * H:2 * H])
        g_g = jnp.tanh(gates[:, 2 * H:3 * H])
        o_g = jax.nn.sigmoid(gates[:, 3 * H:4 * H])

        c = f_g * c + i_g * g_g
        h = o_g * jnp.tanh(c)

        # Off the critical path: nothing later in the loop reads out_ref.
        # (At H=32 this store is necessarily <128-lane; at realistic H>=128
        # it becomes lane-dense automatically.)
        out_ref[t] = h.astype(out_ref.dtype)

    hT_ref[...] = h.astype(hT_ref.dtype)
    cT_ref[...] = c.astype(cT_ref.dtype)


@jax.jit
def lstm_pallas(embedded, w_ih, w_hh, b_ih, b_hh, h0, c0):
    """embedded: (T, B, H); w_ih/w_hh: (4H, H); b_*: (4H,); h0/c0: (B, H)."""
    T, B, H = embedded.shape
    f32 = jnp.float32
    embedded = embedded.astype(f32)
    wih_t = jnp.transpose(w_ih).astype(f32)                       # (H, 4H)
    whh_t = jnp.transpose(w_hh).astype(f32)                       # (H, 4H)
    bias = (b_ih + b_hh).astype(f32)                              # (4H,)

    # Hoisted input projection: one (T*B, H) x (H, 4H) MXU matmul covering all
    # timesteps, with the bias folded in so the recurrent loop has no per-step
    # bias add.
    xg = jnp.einsum("tbh,hg->tbg", embedded, wih_t,
                    preferred_element_type=f32) + bias            # (T, B, 4H)

    vmem = pl.BlockSpec(memory_space=pltpu.MemorySpace.VMEM)
    out_shapes = (
        jax.ShapeDtypeStruct((T, B, H), f32),   # per-step hidden states
        jax.ShapeDtypeStruct((B, H), f32),      # final h
        jax.ShapeDtypeStruct((B, H), f32),      # final c
    )

    output, hT, cT = pl.pallas_call(
        _lstm_recurrence_kernel,
        out_shape=out_shapes,
        in_specs=[vmem, vmem, vmem, vmem],
        out_specs=(vmem, vmem, vmem),
    )(xg, whh_t, h0.astype(f32), c0.astype(f32))
    return output, hT, cT


@functools.partial(jax.jit, static_argnames=("q_output",))
def encoder_rnn_forward(params, input_ids, hidden, q_output=False):
    """Mirrors EncoderRNN.forward.

    input_ids: (T, B) int32 token ids (or (T, B, H) floats if q_output=True)
    hidden: tuple (h0, c0) each (1, B, H)
    returns (output (T, B, H), (h_n (1, B, H), c_n (1, B, H)))
    """
    if not q_output:
        embedded = jnp.take(params["embedding"], input_ids, axis=0)   # (T, B, H)
    else:
        embedded = input_ids
    h0, c0 = hidden
    output, hT, cT = lstm_pallas(
        embedded, params["w_ih"], params["w_hh"],
        params["b_ih"], params["b_hh"], h0[0], c0[0])
    return output, (hT[None], cT[None])


def _lstm_reference(embedded, w_ih, w_hh, b_ih, b_hh, h0, c0):
    """Pure-JAX reference (PyTorch nn.LSTM semantics, gate order i,f,g,o)."""
    H = h0.shape[-1]
    b = b_ih + b_hh

    def step(carry, x_t):
        h, c = carry
        gates = x_t @ w_ih.T + h @ w_hh.T + b
        i = jax.nn.sigmoid(gates[:, 0 * H:1 * H])
        f = jax.nn.sigmoid(gates[:, 1 * H:2 * H])
        g = jnp.tanh(gates[:, 2 * H:3 * H])
        o = jax.nn.sigmoid(gates[:, 3 * H:4 * H])
        c_new = f * c + i * g
        h_new = o * jnp.tanh(c_new)
        return (h_new, c_new), h_new

    (hT, cT), outs = lax.scan(step, (h0, c0), embedded)
    return outs, hT, cT


if __name__ == "__main__":
    # Small deterministic config: vocab=50, hidden=32, batch=2, seq_len=16.
    input_size, hidden_size, batch_size, seq_len = 50, 32, 2, 16
    key = jax.random.PRNGKey(0)
    k_emb, k_wih, k_whh, k_bih, k_bhh, k_ids = jax.random.split(key, 6)

    scale = 0.1
    params = {
        "embedding": scale * jax.random.normal(
            k_emb, (input_size, hidden_size), jnp.float32),
        "w_ih": scale * jax.random.normal(
            k_wih, (4 * hidden_size, hidden_size), jnp.float32),
        "w_hh": scale * jax.random.normal(
            k_whh, (4 * hidden_size, hidden_size), jnp.float32),
        "b_ih": scale * jax.random.normal(k_bih, (4 * hidden_size,), jnp.float32),
        "b_hh": scale * jax.random.normal(k_bhh, (4 * hidden_size,), jnp.float32),
    }

    input_ids = jax.random.randint(
        k_ids, (seq_len, batch_size), 0, input_size, jnp.int32)   # 16 x B
    hidden = (jnp.zeros((1, batch_size, hidden_size), jnp.float32),
              jnp.zeros((1, batch_size, hidden_size), jnp.float32))

    output, (h_n, c_n) = encoder_rnn_forward(params, input_ids, hidden)
    jax.block_until_ready((output, h_n, c_n))

    # Correctness check against a pure-JAX LSTM reference.
    embedded = jnp.take(params["embedding"], input_ids, axis=0)
    ref_out, ref_h, ref_c = _lstm_reference(
        embedded, params["w_ih"], params["w_hh"],
        params["b_ih"], params["b_hh"], hidden[0][0], hidden[1][0])
    assert jnp.allclose(output, ref_out, atol=1e-4), "output mismatch"
    assert jnp.allclose(h_n[0], ref_h, atol=1e-4), "h_n mismatch"
    assert jnp.allclose(c_n[0], ref_c, atol=1e-4), "c_n mismatch"

    print("KERNEL_OK")
</pallas_src>

<mosaic_0001>
module attributes {stable_mosaic.version = 11 : i64} {
  func.func @_lstm_recurrence_kernel(%arg0: memref<16x2x128xf32, #tpu.memory_space<vmem>>, %arg1: memref<32x128xf32, #tpu.memory_space<vmem>>, %arg2: memref<2x32xf32, #tpu.memory_space<vmem>>, %arg3: memref<2x32xf32, #tpu.memory_space<vmem>>, %arg4: memref<16x2x32xf32, #tpu.memory_space<vmem>>, %arg5: memref<2x32xf32, #tpu.memory_space<vmem>>, %arg6: memref<2x32xf32, #tpu.memory_space<vmem>>) attributes {dimension_semantics = [], scalar_prefetch = 0 : i64, scratch_operands = 0 : i64, tpu.core_type = #tpu.core_type<tc>} {
    %c0 = arith.constant 0 : index
    %c0_0 = arith.constant 0 : index
    %0 = vector.load %arg1[%c0, %c0_0] : memref<32x128xf32, #tpu.memory_space<vmem>>, vector<32x128xf32>
    %c0_1 = arith.constant 0 : index
    %c0_2 = arith.constant 0 : index
    %1 = vector.load %arg2[%c0_1, %c0_2] : memref<2x32xf32, #tpu.memory_space<vmem>>, vector<2x32xf32>
    %c0_3 = arith.constant 0 : index
    %c0_4 = arith.constant 0 : index
    %2 = vector.load %arg3[%c0_3, %c0_4] : memref<2x32xf32, #tpu.memory_space<vmem>>, vector<2x32xf32>
    %c0_5 = arith.constant 0 : index
    %c0_6 = arith.constant 0 : index
    %c0_7 = arith.constant 0 : index
    %3 = vector.load %arg0[%c0_5, %c0_6, %c0_7] : memref<16x2x128xf32, #tpu.memory_space<vmem>>, vector<1x2x128xf32>
    %4 = vector.shape_cast %3 : vector<1x2x128xf32> to vector<2x128xf32>
    %cst = arith.constant dense<0.000000e+00> : vector<2x128xf32>
    %5 = tpu.matmul %1, %0, %cst {dimension_numbers = #tpu.dot_dimension_numbers<[1], [0], [0], [1], [0, 0, 1, 1], [], []>} : vector<2x32xf32>, vector<32x128xf32>, vector<2x128xf32> -> vector<2x128xf32>
    %6 = arith.addf %4, %5 : vector<2x128xf32>
    %7 = vector.extract_strided_slice %6 {offsets = [0, 0], sizes = [2, 32], strides = [1, 1]} : vector<2x128xf32> to vector<2x32xf32>
    %8 = arith.negf %7 : vector<2x32xf32>
    %9 = math.exp %8 : vector<2x32xf32>
    %cst_8 = arith.constant 1.000000e+00 : f32
    %10 = vector.broadcast %cst_8 : f32 to vector<2x32xf32>
    %11 = arith.addf %10, %9 : vector<2x32xf32>
    %12 = arith.divf %10, %11 : vector<2x32xf32>
    %13 = vector.extract_strided_slice %6 {offsets = [0, 32], sizes = [2, 32], strides = [1, 1]} : vector<2x128xf32> to vector<2x32xf32>
    %14 = arith.negf %13 : vector<2x32xf32>
    %15 = math.exp %14 : vector<2x32xf32>
    %cst_9 = arith.constant 1.000000e+00 : f32
    %16 = vector.broadcast %cst_9 : f32 to vector<2x32xf32>
    %17 = arith.addf %16, %15 : vector<2x32xf32>
    %18 = arith.divf %16, %17 : vector<2x32xf32>
    %19 = vector.extract_strided_slice %6 {offsets = [0, 64], sizes = [2, 32], strides = [1, 1]} : vector<2x128xf32> to vector<2x32xf32>
    %20 = math.tanh %19 : vector<2x32xf32>
    %21 = vector.extract_strided_slice %6 {offsets = [0, 96], sizes = [2, 32], strides = [1, 1]} : vector<2x128xf32> to vector<2x32xf32>
    %22 = arith.negf %21 : vector<2x32xf32>
    %23 = math.exp %22 : vector<2x32xf32>
    %cst_10 = arith.constant 1.000000e+00 : f32
    %24 = vector.broadcast %cst_10 : f32 to vector<2x32xf32>
    %25 = arith.addf %24, %23 : vector<2x32xf32>
    %26 = arith.divf %24, %25 : vector<2x32xf32>
    %27 = arith.mulf %18, %2 : vector<2x32xf32>
    %28 = arith.mulf %12, %20 : vector<2x32xf32>
    %29 = arith.addf %27, %28 : vector<2x32xf32>
    %30 = math.tanh %29 : vector<2x32xf32>
    %31 = arith.mulf %26, %30 : vector<2x32xf32>
    %c0_11 = arith.constant 0 : index
    %c0_12 = arith.constant 0 : index
    %c0_13 = arith.constant 0 : index
    %32 = vector.load %arg4[%c0_11, %c0_12, %c0_13] : memref<16x2x32xf32, #tpu.memory_space<vmem>>, vector<1x2x32xf32>
    %33 = vector.shape_cast %32 : vector<1x2x32xf32> to vector<2x32xf32>
    %34 = vector.shape_cast %31 : vector<2x32xf32> to vector<1x2x32xf32>
    tpu.vector_store %arg4[%c0_11, %c0_12, %c0_13], %34 {strides = array<i32>} : memref<16x2x32xf32, #tpu.memory_space<vmem>>, vector<1x2x32xf32>,
    %c1 = arith.constant 1 : index
    %c0_14 = arith.constant 0 : index
    %c0_15 = arith.constant 0 : index
    %35 = vector.load %arg0[%c1, %c0_14, %c0_15] : memref<16x2x128xf32, #tpu.memory_space<vmem>>, vector<1x2x128xf32>
    %36 = vector.shape_cast %35 : vector<1x2x128xf32> to vector<2x128xf32>
    %cst_16 = arith.constant dense<0.000000e+00> : vector<2x128xf32>
    %37 = tpu.matmul %31, %0, %cst_16 {dimension_numbers = #tpu.dot_dimension_numbers<[1], [0], [0], [1], [0, 0, 1, 1], [], []>} : vector<2x32xf32>, vector<32x128xf32>, vector<2x128xf32> -> vector<2x128xf32>
    %38 = arith.addf %36, %37 : vector<2x128xf32>
    %39 = vector.extract_strided_slice %38 {offsets = [0, 0], sizes = [2, 32], strides = [1, 1]} : vector<2x128xf32> to vector<2x32xf32>
    %40 = arith.negf %39 : vector<2x32xf32>
    %41 = math.exp %40 : vector<2x32xf32>
    %cst_17 = arith.constant 1.000000e+00 : f32
    %42 = vector.broadcast %cst_17 : f32 to vector<2x32xf32>
    %43 = arith.addf %42, %41 : vector<2x32xf32>
    %44 = arith.divf %42, %43 : vector<2x32xf32>
    %45 = vector.extract_strided_slice %38 {offsets = [0, 32], sizes = [2, 32], strides = [1, 1]} : vector<2x128xf32> to vector<2x32xf32>
    %46 = arith.negf %45 : vector<2x32xf32>
    %47 = math.exp %46 : vector<2x32xf32>
    %cst_18 = arith.constant 1.000000e+00 : f32
    %48 = vector.broadcast %cst_18 : f32 to vector<2x32xf32>
    %49 = arith.addf %48, %47 : vector<2x32xf32>
    %50 = arith.divf %48, %49 : vector<2x32xf32>
    %51 = vector.extract_strided_slice %38 {offsets = [0, 64], sizes = [2, 32], strides = [1, 1]} : vector<2x128xf32> to vector<2x32xf32>
    %52 = math.tanh %51 : vector<2x32xf32>
    %53 = vector.extract_strided_slice %38 {offsets = [0, 96], sizes = [2, 32], strides = [1, 1]} : vector<2x128xf32> to vector<2x32xf32>
    %54 = arith.negf %53 : vector<2x32xf32>
    %55 = math.exp %54 : vector<2x32xf32>
    %cst_19 = arith.constant 1.000000e+00 : f32
    %56 = vector.broadcast %cst_19 : f32 to vector<2x32xf32>
    %57 = arith.addf %56, %55 : vector<2x32xf32>
    %58 = arith.divf %56, %57 : vector<2x32xf32>
    %59 = arith.mulf %50, %29 : vector<2x32xf32>
    %60 = arith.mulf %44, %52 : vector<2x32xf32>
    %61 = arith.addf %59, %60 : vector<2x32xf32>
    %62 = math.tanh %61 : vector<2x32xf32>
    %63 = arith.mulf %58, %62 : vector<2x32xf32>
    %c1_20 = arith.constant 1 : index
    %c0_21 = arith.constant 0 : index
    %c0_22 = arith.constant 0 : index
    %64 = vector.load %arg4[%c1_20, %c0_21, %c0_22] : memref<16x2x32xf32, #tpu.memory_space<vmem>>, vector<1x2x32xf32>
    %65 = vector.shape_cast %64 : vector<1x2x32xf32> to vector<2x32xf32>
    %66 = vector.shape_cast %63 : vector<2x32xf32> to vector<1x2x32xf32>
    tpu.vector_store %arg4[%c1_20, %c0_21, %c0_22], %66 {strides = array<i32>} : memref<16x2x32xf32, #tpu.memory_space<vmem>>, vector<1x2x32xf32>,
    %c2 = arith.constant 2 : index
    %c0_23 = arith.constant 0 : index
    %c0_24 = arith.constant 0 : index
    %67 = vector.load %arg0[%c2, %c0_23, %c0_24] : memref<16x2x128xf32, #tpu.memory_space<vmem>>, vector<1x2x128xf32>
    %68 = vector.shape_cast %67 : vector<1x2x128xf32> to vector<2x128xf32>
    %cst_25 = arith.constant dense<0.000000e+00> : vector<2x128xf32>
    %69 = tpu.matmul %63, %0, %cst_25 {dimension_numbers = #tpu.dot_dimension_numbers<[1], [0], [0], [1], [0, 0, 1, 1], [], []>} : vector<2x32xf32>, vector<32x128xf32>, vector<2x128xf32> -> vector<2x128xf32>
    %70 = arith.addf %68, %69 : vector<2x128xf32>
    %71 = vector.extract_strided_slice %70 {offsets = [0, 0], sizes = [2, 32], strides = [1, 1]} : vector<2x128xf32> to vector<2x32xf32>
    %72 = arith.negf %71 : vector<2x32xf32>
    %73 = math.exp %72 : vector<2x32xf32>
    %cst_26 = arith.constant 1.000000e+00 : f32
    %74 = vector.broadcast %cst_26 : f32 to vector<2x32xf32>
    %75 = arith.addf %74, %73 : vector<2x32xf32>
    %76 = arith.divf %74, %75 : vector<2x32xf32>
    %77 = vector.extract_strided_slice %70 {offsets = [0, 32], sizes = [2, 32], strides = [1, 1]} : vector<2x128xf32> to vector<2x32xf32>
    %78 = arith.negf %77 : vector<2x32xf32>
    %79 = math.exp %78 : vector<2x32xf32>
    %cst_27 = arith.constant 1.000000e+00 : f32
    %80 = vector.broadcast %cst_27 : f32 to vector<2x32xf32>
    %81 = arith.addf %80, %79 : vector<2x32xf32>
    %82 = arith.divf %80, %81 : vector<2x32xf32>
    %83 = vector.extract_strided_slice %70 {offsets = [0, 64], sizes = [2, 32], strides = [1, 1]} : vector<2x128xf32> to vector<2x32xf32>
    %84 = math.tanh %83 : vector<2x32xf32>
    %85 = vector.extract_strided_slice %70 {offsets = [0, 96], sizes = [2, 32], strides = [1, 1]} : vector<2x128xf32> to vector<2x32xf32>
    %86 = arith.negf %85 : vector<2x32xf32>
    %87 = math.exp %86 : vector<2x32xf32>
    %cst_28 = arith.constant 1.000000e+00 : f32
    %88 = vector.broadcast %cst_28 : f32 to vector<2x32xf32>
    %89 = arith.addf %88, %87 : vector<2x32xf32>
    %90 = arith.divf %88, %89 : vector<2x32xf32>
    %91 = arith.mulf %82, %61 : vector<2x32xf32>
    %92 = arith.mulf %76, %84 : vector<2x32xf32>
    %93 = arith.addf %91, %92 : vector<2x32xf32>
    %94 = math.tanh %93 : vector<2x32xf32>
    %95 = arith.mulf %90, %94 : vector<2x32xf32>
    %c2_29 = arith.constant 2 : index
    %c0_30 = arith.constant 0 : index
    %c0_31 = arith.constant 0 : index
    %96 = vector.load %arg4[%c2_29, %c0_30, %c0_31] : memref<16x2x32xf32, #tpu.memory_space<vmem>>, vector<1x2x32xf32>
    %97 = vector.shape_cast %96 : vector<1x2x32xf32> to vector<2x32xf32>
    %98 = vector.shape_cast %95 : vector<2x32xf32> to vector<1x2x32xf32>
    tpu.vector_store %arg4[%c2_29, %c0_30, %c0_31], %98 {strides = array<i32>} : memref<16x2x32xf32, #tpu.memory_space<vmem>>, vector<1x2x32xf32>,
    %c3 = arith.constant 3 : index
    %c0_32 = arith.constant 0 : index
    %c0_33 = arith.constant 0 : index
    %99 = vector.load %arg0[%c3, %c0_32, %c0_33] : memref<16x2x128xf32, #tpu.memory_space<vmem>>, vector<1x2x128xf32>
    %100 = vector.shape_cast %99 : vector<1x2x128xf32> to vector<2x128xf32>
    %cst_34 = arith.constant dense<0.000000e+00> : vector<2x128xf32>
    %101 = tpu.matmul %95, %0, %cst_34 {dimension_numbers = #tpu.dot_dimension_numbers<[1], [0], [0], [1], [0, 0, 1, 1], [], []>} : vector<2x32xf32>, vector<32x128xf32>, vector<2x128xf32> -> vector<2x128xf32>
    %102 = arith.addf %100, %101 : vector<2x128xf32>
    %103 = vector.extract_strided_slice %102 {offsets = [0, 0], sizes = [2, 32], strides = [1, 1]} : vector<2x128xf32> to vector<2x32xf32>
    %104 = arith.negf %103 : vector<2x32xf32>
    %105 = math.exp %104 : vector<2x32xf32>
    %cst_35 = arith.constant 1.000000e+00 : f32
    %106 = vector.broadcast %cst_35 : f32 to vector<2x32xf32>
    %107 = arith.addf %106, %105 : vector<2x32xf32>
    %108 = arith.divf %106, %107 : vector<2x32xf32>
    %109 = vector.extract_strided_slice %102 {offsets = [0, 32], sizes = [2, 32], strides = [1, 1]} : vector<2x128xf32> to vector<2x32xf32>
    %110 = arith.negf %109 : vector<2x32xf32>
    %111 = math.exp %110 : vector<2x32xf32>
    %cst_36 = arith.constant 1.000000e+00 : f32
    %112 = vector.broadcast %cst_36 : f32 to vector<2x32xf32>
    %113 = arith.addf %112, %111 : vector<2x32xf32>
    %114 = arith.divf %112, %113 : vector<2x32xf32>
    %115 = vector.extract_strided_slice %102 {offsets = [0, 64], sizes = [2, 32], strides = [1, 1]} : vector<2x128xf32> to vector<2x32xf32>
    %116 = math.tanh %115 : vector<2x32xf32>
    %117 = vector.extract_strided_slice %102 {offsets = [0, 96], sizes = [2, 32], strides = [1, 1]} : vector<2x128xf32> to vector<2x32xf32>
    %118 = arith.negf %117 : vector<2x32xf32>
    %119 = math.exp %118 : vector<2x32xf32>
    %cst_37 = arith.constant 1.000000e+00 : f32
    %120 = vector.broadcast %cst_37 : f32 to vector<2x32xf32>
    %121 = arith.addf %120, %119 : vector<2x32xf32>
    %122 = arith.divf %120, %121 : vector<2x32xf32>
    %123 = arith.mulf %114, %93 : vector<2x32xf32>
    %124 = arith.mulf %108, %116 : vector<2x32xf32>
    %125 = arith.addf %123, %124 : vector<2x32xf32>
    %126 = math.tanh %125 : vector<2x32xf32>
    %127 = arith.mulf %122, %126 : vector<2x32xf32>
    %c3_38 = arith.constant 3 : index
    %c0_39 = arith.constant 0 : index
    %c0_40 = arith.constant 0 : index
    %128 = vector.load %arg4[%c3_38, %c0_39, %c0_40] : memref<16x2x32xf32, #tpu.memory_space<vmem>>, vector<1x2x32xf32>
    %129 = vector.shape_cast %128 : vector<1x2x32xf32> to vector<2x32xf32>
    %130 = vector.shape_cast %127 : vector<2x32xf32> to vector<1x2x32xf32>
    tpu.vector_store %arg4[%c3_38, %c0_39, %c0_40], %130 {strides = array<i32>} : memref<16x2x32xf32, #tpu.memory_space<vmem>>, vector<1x2x32xf32>,
    %c4 = arith.constant 4 : index
    %c0_41 = arith.constant 0 : index
    %c0_42 = arith.constant 0 : index
    %131 = vector.load %arg0[%c4, %c0_41, %c0_42] : memref<16x2x128xf32, #tpu.memory_space<vmem>>, vector<1x2x128xf32>
    %132 = vector.shape_cast %131 : vector<1x2x128xf32> to vector<2x128xf32>
    %cst_43 = arith.constant dense<0.000000e+00> : vector<2x128xf32>
    %133 = tpu.matmul %127, %0, %cst_43 {dimension_numbers = #tpu.dot_dimension_numbers<[1], [0], [0], [1], [0, 0, 1, 1], [], []>} : vector<2x32xf32>, vector<32x128xf32>, vector<2x128xf32> -> vector<2x128xf32>
    %134 = arith.addf %132, %133 : vector<2x128xf32>
    %135 = vector.extract_strided_slice %134 {offsets = [0, 0], sizes = [2, 32], strides = [1, 1]} : vector<2x128xf32> to vector<2x32xf32>
    %136 = arith.negf %135 : vector<2x32xf32>
    %137 = math.exp %136 : vector<2x32xf32>
    %cst_44 = arith.constant 1.000000e+00 : f32
    %138 = vector.broadcast %cst_44 : f32 to vector<2x32xf32>
    %139 = arith.addf %138, %137 : vector<2x32xf32>
    %140 = arith.divf %138, %139 : vector<2x32xf32>
    %141 = vector.extract_strided_slice %134 {offsets = [0, 32], sizes = [2, 32], strides = [1, 1]} : vector<2x128xf32> to vector<2x32xf32>
    %142 = arith.negf %141 : vector<2x32xf32>
    %143 = math.exp %142 : vector<2x32xf32>
    %cst_45 = arith.constant 1.000000e+00 : f32
    %144 = vector.broadcast %cst_45 : f32 to vector<2x32xf32>
    %145 = arith.addf %144, %143 : vector<2x32xf32>
    %146 = arith.divf %144, %145 : vector<2x32xf32>
    %147 = vector.extract_strided_slice %134 {offsets = [0, 64], sizes = [2, 32], strides = [1, 1]} : vector<2x128xf32> to vector<2x32xf32>
    %148 = math.tanh %147 : vector<2x32xf32>
    %149 = vector.extract_strided_slice %134 {offsets = [0, 96], sizes = [2, 32], strides = [1, 1]} : vector<2x128xf32> to vector<2x32xf32>
    %150 = arith.negf %149 : vector<2x32xf32>
    %151 = math.exp %150 : vector<2x32xf32>
    %cst_46 = arith.constant 1.000000e+00 : f32
    %152 = vector.broadcast %cst_46 : f32 to vector<2x32xf32>
    %153 = arith.addf %152, %151 : vector<2x32xf32>
    %154 = arith.divf %152, %153 : vector<2x32xf32>
    %155 = arith.mulf %146, %125 : vector<2x32xf32>
    %156 = arith.mulf %140, %148 : vector<2x32xf32>
    %157 = arith.addf %155, %156 : vector<2x32xf32>
    %158 = math.tanh %157 : vector<2x32xf32>
    %159 = arith.mulf %154, %158 : vector<2x32xf32>
    %c4_47 = arith.constant 4 : index
    %c0_48 = arith.constant 0 : index
    %c0_49 = arith.constant 0 : index
    %160 = vector.load %arg4[%c4_47, %c0_48, %c0_49] : memref<16x2x32xf32, #tpu.memory_space<vmem>>, vector<1x2x32xf32>
    %161 = vector.shape_cast %160 : vector<1x2x32xf32> to vector<2x32xf32>
    %162 = vector.shape_cast %159 : vector<2x32xf32> to vector<1x2x32xf32>
    tpu.vector_store %arg4[%c4_47, %c0_48, %c0_49], %162 {strides = array<i32>} : memref<16x2x32xf32, #tpu.memory_space<vmem>>, vector<1x2x32xf32>,
    %c5 = arith.constant 5 : index
    %c0_50 = arith.constant 0 : index
    %c0_51 = arith.constant 0 : index
    %163 = vector.load %arg0[%c5, %c0_50, %c0_51] : memref<16x2x128xf32, #tpu.memory_space<vmem>>, vector<1x2x128xf32>
    %164 = vector.shape_cast %163 : vector<1x2x128xf32> to vector<2x128xf32>
    %cst_52 = arith.constant dense<0.000000e+00> : vector<2x128xf32>
    %165 = tpu.matmul %159, %0, %cst_52 {dimension_numbers = #tpu.dot_dimension_numbers<[1], [0], [0], [1], [0, 0, 1, 1], [], []>} : vector<2x32xf32>, vector<32x128xf32>, vector<2x128xf32> -> vector<2x128xf32>
    %166 = arith.addf %164, %165 : vector<2x128xf32>
    %167 = vector.extract_strided_slice %166 {offsets = [0, 0], sizes = [2, 32], strides = [1, 1]} : vector<2x128xf32> to vector<2x32xf32>
    %168 = arith.negf %167 : vector<2x32xf32>
    %169 = math.exp %168 : vector<2x32xf32>
    %cst_53 = arith.constant 1.000000e+00 : f32
    %170 = vector.broadcast %cst_53 : f32 to vector<2x32xf32>
    %171 = arith.addf %170, %169 : vector<2x32xf32>
    %172 = arith.divf %170, %171 : vector<2x32xf32>
    %173 = vector.extract_strided_slice %166 {offsets = [0, 32], sizes = [2, 32], strides = [1, 1]} : vector<2x128xf32> to vector<2x32xf32>
    %174 = arith.negf %173 : vector<2x32xf32>
    %175 = math.exp %174 : vector<2x32xf32>
    %cst_54 = arith.constant 1.000000e+00 : f32
    %176 = vector.broadcast %cst_54 : f32 to vector<2x32xf32>
    %177 = arith.addf %176, %175 : vector<2x32xf32>
    %178 = arith.divf %176, %177 : vector<2x32xf32>
    %179 = vector.extract_strided_slice %166 {offsets = [0, 64], sizes = [2, 32], strides = [1, 1]} : vector<2x128xf32> to vector<2x32xf32>
    %180 = math.tanh %179 : vector<2x32xf32>
    %181 = vector.extract_strided_slice %166 {offsets = [0, 96], sizes = [2, 32], strides = [1, 1]} : vector<2x128xf32> to vector<2x32xf32>
    %182 = arith.negf %181 : vector<2x32xf32>
    %183 = math.exp %182 : vector<2x32xf32>
    %cst_55 = arith.constant 1.000000e+00 : f32
    %184 = vector.broadcast %cst_55 : f32 to vector<2x32xf32>
    %185 = arith.addf %184, %183 : vector<2x32xf32>
    %186 = arith.divf %184, %185 : vector<2x32xf32>
    %187 = arith.mulf %178, %157 : vector<2x32xf32>
    %188 = arith.mulf %172, %180 : vector<2x32xf32>
    %189 = arith.addf %187, %188 : vector<2x32xf32>
    %190 = math.tanh %189 : vector<2x32xf32>
    %191 = arith.mulf %186, %190 : vector<2x32xf32>
    %c5_56 = arith.constant 5 : index
    %c0_57 = arith.constant 0 : index
    %c0_58 = arith.constant 0 : index
    %192 = vector.load %arg4[%c5_56, %c0_57, %c0_58] : memref<16x2x32xf32, #tpu.memory_space<vmem>>, vector<1x2x32xf32>
    %193 = vector.shape_cast %192 : vector<1x2x32xf32> to vector<2x32xf32>
    %194 = vector.shape_cast %191 : vector<2x32xf32> to vector<1x2x32xf32>
    tpu.vector_store %arg4[%c5_56, %c0_57, %c0_58], %194 {strides = array<i32>} : memref<16x2x32xf32, #tpu.memory_space<vmem>>, vector<1x2x32xf32>,
    %c6 = arith.constant 6 : index
    %c0_59 = arith.constant 0 : index
    %c0_60 = arith.constant 0 : index
    %195 = vector.load %arg0[%c6, %c0_59, %c0_60] : memref<16x2x128xf32, #tpu.memory_space<vmem>>, vector<1x2x128xf32>
    %196 = vector.shape_cast %195 : vector<1x2x128xf32> to vector<2x128xf32>
    %cst_61 = arith.constant dense<0.000000e+00> : vector<2x128xf32>
    %197 = tpu.matmul %191, %0, %cst_61 {dimension_numbers = #tpu.dot_dimension_numbers<[1], [0], [0], [1], [0, 0, 1, 1], [], []>} : vector<2x32xf32>, vector<32x128xf32>, vector<2x128xf32> -> vector<2x128xf32>
    %198 = arith.addf %196, %197 : vector<2x128xf32>
    %199 = vector.extract_strided_slice %198 {offsets = [0, 0], sizes = [2, 32], strides = [1, 1]} : vector<2x128xf32> to vector<2x32xf32>
    %200 = arith.negf %199 : vector<2x32xf32>
    %201 = math.exp %200 : vector<2x32xf32>
    %cst_62 = arith.constant 1.000000e+00 : f32
    %202 = vector.broadcast %cst_62 : f32 to vector<2x32xf32>
    %203 = arith.addf %202, %201 : vector<2x32xf32>
    %204 = arith.divf %202, %203 : vector<2x32xf32>
    %205 = vector.extract_strided_slice %198 {offsets = [0, 32], sizes = [2, 32], strides = [1, 1]} : vector<2x128xf32> to vector<2x32xf32>
    %206 = arith.negf %205 : vector<2x32xf32>
    %207 = math.exp %206 : vector<2x32xf32>
    %cst_63 = arith.constant 1.000000e+00 : f32
    %208 = vector.broadcast %cst_63 : f32 to vector<2x32xf32>
    %209 = arith.addf %208, %207 : vector<2x32xf32>
    %210 = arith.divf %208, %209 : vector<2x32xf32>
    %211 = vector.extract_strided_slice %198 {offsets = [0, 64], sizes = [2, 32], strides = [1, 1]} : vector<2x128xf32> to vector<2x32xf32>
    %212 = math.tanh %211 : vector<2x32xf32>
    %213 = vector.extract_strided_slice %198 {offsets = [0, 96], sizes = [2, 32], strides = [1, 1]} : vector<2x128xf32> to vector<2x32xf32>
    %214 = arith.negf %213 : vector<2x32xf32>
    %215 = math.exp %214 : vector<2x32xf32>
    %cst_64 = arith.constant 1.000000e+00 : f32
    %216 = vector.broadcast %cst_64 : f32 to vector<2x32xf32>
    %217 = arith.addf %216, %215 : vector<2x32xf32>
    %218 = arith.divf %216, %217 : vector<2x32xf32>
    %219 = arith.mulf %210, %189 : vector<2x32xf32>
    %220 = arith.mulf %204, %212 : vector<2x32xf32>
    %221 = arith.addf %219, %220 : vector<2x32xf32>
    %222 = math.tanh %221 : vector<2x32xf32>
    %223 = arith.mulf %218, %222 : vector<2x32xf32>
    %c6_65 = arith.constant 6 : index
    %c0_66 = arith.constant 0 : index
    %c0_67 = arith.constant 0 : index
    %224 = vector.load %arg4[%c6_65, %c0_66, %c0_67] : memref<16x2x32xf32, #tpu.memory_space<vmem>>, vector<1x2x32xf32>
    %225 = vector.shape_cast %224 : vector<1x2x32xf32> to vector<2x32xf32>
    %226 = vector.shape_cast %223 : vector<2x32xf32> to vector<1x2x32xf32>
    tpu.vector_store %arg4[%c6_65, %c0_66, %c0_67], %226 {strides = array<i32>} : memref<16x2x32xf32, #tpu.memory_space<vmem>>, vector<1x2x32xf32>,
    %c7 = arith.constant 7 : index
    %c0_68 = arith.constant 0 : index
    %c0_69 = arith.constant 0 : index
    %227 = vector.load %arg0[%c7, %c0_68, %c0_69] : memref<16x2x128xf32, #tpu.memory_space<vmem>>, vector<1x2x128xf32>
    %228 = vector.shape_cast %227 : vector<1x2x128xf32> to vector<2x128xf32>
    %cst_70 = arith.constant dense<0.000000e+00> : vector<2x128xf32>
    %229 = tpu.matmul %223, %0, %cst_70 {dimension_numbers = #tpu.dot_dimension_numbers<[1], [0], [0], [1], [0, 0, 1, 1], [], []>} : vector<2x32xf32>, vector<32x128xf32>, vector<2x128xf32> -> vector<2x128xf32>
    %230 = arith.addf %228, %229 : vector<2x128xf32>
    %231 = vector.extract_strided_slice %230 {offsets = [0, 0], sizes = [2, 32], strides = [1, 1]} : vector<2x128xf32> to vector<2x32xf32>
    %232 = arith.negf %231 : vector<2x32xf32>
    %233 = math.exp %232 : vector<2x32xf32>
    %cst_71 = arith.constant 1.000000e+00 : f32
    %234 = vector.broadcast %cst_71 : f32 to vector<2x32xf32>
    %235 = arith.addf %234, %233 : vector<2x32xf32>
    %236 = arith.divf %234, %235 : vector<2x32xf32>
    %237 = vector.extract_strided_slice %230 {offsets = [0, 32], sizes = [2, 32], strides = [1, 1]} : vector<2x128xf32> to vector<2x32xf32>
    %238 = arith.negf %237 : vector<2x32xf32>
    %239 = math.exp %238 : vector<2x32xf32>
    %cst_72 = arith.constant 1.000000e+00 : f32
    %240 = vector.broadcast %cst_72 : f32 to vector<2x32xf32>
    %241 = arith.addf %240, %239 : vector<2x32xf32>
    %242 = arith.divf %240, %241 : vector<2x32xf32>
    %243 = vector.extract_strided_slice %230 {offsets = [0, 64], sizes = [2, 32], strides = [1, 1]} : vector<2x128xf32> to vector<2x32xf32>
    %244 = math.tanh %243 : vector<2x32xf32>
    %245 = vector.extract_strided_slice %230 {offsets = [0, 96], sizes = [2, 32], strides = [1, 1]} : vector<2x128xf32> to vector<2x32xf32>
    %246 = arith.negf %245 : vector<2x32xf32>
    %247 = math.exp %246 : vector<2x32xf32>
    %cst_73 = arith.constant 1.000000e+00 : f32
    %248 = vector.broadcast %cst_73 : f32 to vector<2x32xf32>
    %249 = arith.addf %248, %247 : vector<2x32xf32>
    %250 = arith.divf %248, %249 : vector<2x32xf32>
    %251 = arith.mulf %242, %221 : vector<2x32xf32>
    %252 = arith.mulf %236, %244 : vector<2x32xf32>
    %253 = arith.addf %251, %252 : vector<2x32xf32>
    %254 = math.tanh %253 : vector<2x32xf32>
    %255 = arith.mulf %250, %254 : vector<2x32xf32>
    %c7_74 = arith.constant 7 : index
    %c0_75 = arith.constant 0 : index
    %c0_76 = arith.constant 0 : index
    %256 = vector.load %arg4[%c7_74, %c0_75, %c0_76] : memref<16x2x32xf32, #tpu.memory_space<vmem>>, vector<1x2x32xf32>
    %257 = vector.shape_cast %256 : vector<1x2x32xf32> to vector<2x32xf32>
    %258 = vector.shape_cast %255 : vector<2x32xf32> to vector<1x2x32xf32>
    tpu.vector_store %arg4[%c7_74, %c0_75, %c0_76], %258 {strides = array<i32>} : memref<16x2x32xf32, #tpu.memory_space<vmem>>, vector<1x2x32xf32>,
    %c8 = arith.constant 8 : index
    %c0_77 = arith.constant 0 : index
    %c0_78 = arith.constant 0 : index
    %259 = vector.load %arg0[%c8, %c0_77, %c0_78] : memref<16x2x128xf32, #tpu.memory_space<vmem>>, vector<1x2x128xf32>
    %260 = vector.shape_cast %259 : vector<1x2x128xf32> to vector<2x128xf32>
    %cst_79 = arith.constant dense<0.000000e+00> : vector<2x128xf32>
    %261 = tpu.matmul %255, %0, %cst_79 {dimension_numbers = #tpu.dot_dimension_numbers<[1], [0], [0], [1], [0, 0, 1, 1], [], []>} : vector<2x32xf32>, vector<32x128xf32>, vector<2x128xf32> -> vector<2x128xf32>
    %262 = arith.addf %260, %261 : vector<2x128xf32>
    %263 = vector.extract_strided_slice %262 {offsets = [0, 0], sizes = [2, 32], strides = [1, 1]} : vector<2x128xf32> to vector<2x32xf32>
    %264 = arith.negf %263 : vector<2x32xf32>
    %265 = math.exp %264 : vector<2x32xf32>
    %cst_80 = arith.constant 1.000000e+00 : f32
    %266 = vector.broadcast %cst_80 : f32 to vector<2x32xf32>
    %267 = arith.addf %266, %265 : vector<2x32xf32>
    %268 = arith.divf %266, %267 : vector<2x32xf32>
    %269 = vector.extract_strided_slice %262 {offsets = [0, 32], sizes = [2, 32], strides = [1, 1]} : vector<2x128xf32> to vector<2x32xf32>
    %270 = arith.negf %269 : vector<2x32xf32>
    %271 = math.exp %270 : vector<2x32xf32>
    %cst_81 = arith.constant 1.000000e+00 : f32
    %272 = vector.broadcast %cst_81 : f32 to vector<2x32xf32>
    %273 = arith.addf %272, %271 : vector<2x32xf32>
    %274 = arith.divf %272, %273 : vector<2x32xf32>
    %275 = vector.extract_strided_slice %262 {offsets = [0, 64], sizes = [2, 32], strides = [1, 1]} : vector<2x128xf32> to vector<2x32xf32>
    %276 = math.tanh %275 : vector<2x32xf32>
    %277 = vector.extract_strided_slice %262 {offsets = [0, 96], sizes = [2, 32], strides = [1, 1]} : vector<2x128xf32> to vector<2x32xf32>
    %278 = arith.negf %277 : vector<2x32xf32>
    %279 = math.exp %278 : vector<2x32xf32>
    %cst_82 = arith.constant 1.000000e+00 : f32
    %280 = vector.broadcast %cst_82 : f32 to vector<2x32xf32>
    %281 = arith.addf %280, %279 : vector<2x32xf32>
    %282 = arith.divf %280, %281 : vector<2x32xf32>
    %283 = arith.mulf %274, %253 : vector<2x32xf32>
    %284 = arith.mulf %268, %276 : vector<2x32xf32>
    %285 = arith.addf %283, %284 : vector<2x32xf32>
    %286 = math.tanh %285 : vector<2x32xf32>
    %287 = arith.mulf %282, %286 : vector<2x32xf32>
    %c8_83 = arith.constant 8 : index
    %c0_84 = arith.constant 0 : index
    %c0_85 = arith.constant 0 : index
    %288 = vector.load %arg4[%c8_83, %c0_84, %c0_85] : memref<16x2x32xf32, #tpu.memory_space<vmem>>, vector<1x2x32xf32>
    %289 = vector.shape_cast %288 : vector<1x2x32xf32> to vector<2x32xf32>
    %290 = vector.shape_cast %287 : vector<2x32xf32> to vector<1x2x32xf32>
    tpu.vector_store %arg4[%c8_83, %c0_84, %c0_85], %290 {strides = array<i32>} : memref<16x2x32xf32, #tpu.memory_space<vmem>>, vector<1x2x32xf32>,
    %c9 = arith.constant 9 : index
    %c0_86 = arith.constant 0 : index
    %c0_87 = arith.constant 0 : index
    %291 = vector.load %arg0[%c9, %c0_86, %c0_87] : memref<16x2x128xf32, #tpu.memory_space<vmem>>, vector<1x2x128xf32>
    %292 = vector.shape_cast %291 : vector<1x2x128xf32> to vector<2x128xf32>
    %cst_88 = arith.constant dense<0.000000e+00> : vector<2x128xf32>
    %293 = tpu.matmul %287, %0, %cst_88 {dimension_numbers = #tpu.dot_dimension_numbers<[1], [0], [0], [1], [0, 0, 1, 1], [], []>} : vector<2x32xf32>, vector<32x128xf32>, vector<2x128xf32> -> vector<2x128xf32>
    %294 = arith.addf %292, %293 : vector<2x128xf32>
    %295 = vector.extract_strided_slice %294 {offsets = [0, 0], sizes = [2, 32], strides = [1, 1]} : vector<2x128xf32> to vector<2x32xf32>
    %296 = arith.negf %295 : vector<2x32xf32>
    %297 = math.exp %296 : vector<2x32xf32>
    %cst_89 = arith.constant 1.000000e+00 : f32
    %298 = vector.broadcast %cst_89 : f32 to vector<2x32xf32>
    %299 = arith.addf %298, %297 : vector<2x32xf32>
    %300 = arith.divf %298, %299 : vector<2x32xf32>
    %301 = vector.extract_strided_slice %294 {offsets = [0, 32], sizes = [2, 32], strides = [1, 1]} : vector<2x128xf32> to vector<2x32xf32>
    %302 = arith.negf %301 : vector<2x32xf32>
    %303 = math.exp %302 : vector<2x32xf32>
    %cst_90 = arith.constant 1.000000e+00 : f32
    %304 = vector.broadcast %cst_90 : f32 to vector<2x32xf32>
    %305 = arith.addf %304, %303 : vector<2x32xf32>
    %306 = arith.divf %304, %305 : vector<2x32xf32>
    %307 = vector.extract_strided_slice %294 {offsets = [0, 64], sizes = [2, 32], strides = [1, 1]} : vector<2x128xf32> to vector<2x32xf32>
    %308 = math.tanh %307 : vector<2x32xf32>
    %309 = vector.extract_strided_slice %294 {offsets = [0, 96], sizes = [2, 32], strides = [1, 1]} : vector<2x128xf32> to vector<2x32xf32>
    %310 = arith.negf %309 : vector<2x32xf32>
    %311 = math.exp %310 : vector<2x32xf32>
    %cst_91 = arith.constant 1.000000e+00 : f32
    %312 = vector.broadcast %cst_91 : f32 to vector<2x32xf32>
    %313 = arith.addf %312, %311 : vector<2x32xf32>
    %314 = arith.divf %312, %313 : vector<2x32xf32>
    %315 = arith.mulf %306, %285 : vector<2x32xf32>
    %316 = arith.mulf %300, %308 : vector<2x32xf32>
    %317 = arith.addf %315, %316 : vector<2x32xf32>
    %318 = math.tanh %317 : vector<2x32xf32>
    %319 = arith.mulf %314, %318 : vector<2x32xf32>
    %c9_92 = arith.constant 9 : index
    %c0_93 = arith.constant 0 : index
    %c0_94 = arith.constant 0 : index
    %320 = vector.load %arg4[%c9_92, %c0_93, %c0_94] : memref<16x2x32xf32, #tpu.memory_space<vmem>>, vector<1x2x32xf32>
    %321 = vector.shape_cast %320 : vector<1x2x32xf32> to vector<2x32xf32>
    %322 = vector.shape_cast %319 : vector<2x32xf32> to vector<1x2x32xf32>
    tpu.vector_store %arg4[%c9_92, %c0_93, %c0_94], %322 {strides = array<i32>} : memref<16x2x32xf32, #tpu.memory_space<vmem>>, vector<1x2x32xf32>,
    %c10 = arith.constant 10 : index
    %c0_95 = arith.constant 0 : index
    %c0_96 = arith.constant 0 : index
    %323 = vector.load %arg0[%c10, %c0_95, %c0_96] : memref<16x2x128xf32, #tpu.memory_space<vmem>>, vector<1x2x128xf32>
    %324 = vector.shape_cast %323 : vector<1x2x128xf32> to vector<2x128xf32>
    %cst_97 = arith.constant dense<0.000000e+00> : vector<2x128xf32>
    %325 = tpu.matmul %319, %0, %cst_97 {dimension_numbers = #tpu.dot_dimension_numbers<[1], [0], [0], [1], [0, 0, 1, 1], [], []>} : vector<2x32xf32>, vector<32x128xf32>, vector<2x128xf32> -> vector<2x128xf32>
    %326 = arith.addf %324, %325 : vector<2x128xf32>
    %327 = vector.extract_strided_slice %326 {offsets = [0, 0], sizes = [2, 32], strides = [1, 1]} : vector<2x128xf32> to vector<2x32xf32>
    %328 = arith.negf %327 : vector<2x32xf32>
    %329 = math.exp %328 : vector<2x32xf32>
    %cst_98 = arith.constant 1.000000e+00 : f32
    %330 = vector.broadcast %cst_98 : f32 to vector<2x32xf32>
    %331 = arith.addf %330, %329 : vector<2x32xf32>
    %332 = arith.divf %330, %331 : vector<2x32xf32>
    %333 = vector.extract_strided_slice %326 {offsets = [0, 32], sizes = [2, 32], strides = [1, 1]} : vector<2x128xf32> to vector<2x32xf32>
    %334 = arith.negf %333 : vector<2x32xf32>
    %335 = math.exp %334 : vector<2x32xf32>
    %cst_99 = arith.constant 1.000000e+00 : f32
    %336 = vector.broadcast %cst_99 : f32 to vector<2x32xf32>
    %337 = arith.addf %336, %335 : vector<2x32xf32>
    %338 = arith.divf %336, %337 : vector<2x32xf32>
    %339 = vector.extract_strided_slice %326 {offsets = [0, 64], sizes = [2, 32], strides = [1, 1]} : vector<2x128xf32> to vector<2x32xf32>
    %340 = math.tanh %339 : vector<2x32xf32>
    %341 = vector.extract_strided_slice %326 {offsets = [0, 96], sizes = [2, 32], strides = [1, 1]} : vector<2x128xf32> to vector<2x32xf32>
    %342 = arith.negf %341 : vector<2x32xf32>
    %343 = math.exp %342 : vector<2x32xf32>
    %cst_100 = arith.constant 1.000000e+00 : f32
    %344 = vector.broadcast %cst_100 : f32 to vector<2x32xf32>
    %345 = arith.addf %344, %343 : vector<2x32xf32>
    %346 = arith.divf %344, %345 : vector<2x32xf32>
    %347 = arith.mulf %338, %317 : vector<2x32xf32>
    %348 = arith.mulf %332, %340 : vector<2x32xf32>
    %349 = arith.addf %347, %348 : vector<2x32xf32>
    %350 = math.tanh %349 : vector<2x32xf32>
    %351 = arith.mulf %346, %350 : vector<2x32xf32>
    %c10_101 = arith.constant 10 : index
    %c0_102 = arith.constant 0 : index
    %c0_103 = arith.constant 0 : index
    %352 = vector.load %arg4[%c10_101, %c0_102, %c0_103] : memref<16x2x32xf32, #tpu.memory_space<vmem>>, vector<1x2x32xf32>
    %353 = vector.shape_cast %352 : vector<1x2x32xf32> to vector<2x32xf32>
    %354 = vector.shape_cast %351 : vector<2x32xf32> to vector<1x2x32xf32>
    tpu.vector_store %arg4[%c10_101, %c0_102, %c0_103], %354 {strides = array<i32>} : memref<16x2x32xf32, #tpu.memory_space<vmem>>, vector<1x2x32xf32>,
    %c11 = arith.constant 11 : index
    %c0_104 = arith.constant 0 : index
    %c0_105 = arith.constant 0 : index
    %355 = vector.load %arg0[%c11, %c0_104, %c0_105] : memref<16x2x128xf32, #tpu.memory_space<vmem>>, vector<1x2x128xf32>
    %356 = vector.shape_cast %355 : vector<1x2x128xf32> to vector<2x128xf32>
    %cst_106 = arith.constant dense<0.000000e+00> : vector<2x128xf32>
    %357 = tpu.matmul %351, %0, %cst_106 {dimension_numbers = #tpu.dot_dimension_numbers<[1], [0], [0], [1], [0, 0, 1, 1], [], []>} : vector<2x32xf32>, vector<32x128xf32>, vector<2x128xf32> -> vector<2x128xf32>
    %358 = arith.addf %356, %357 : vector<2x128xf32>
    %359 = vector.extract_strided_slice %358 {offsets = [0, 0], sizes = [2, 32], strides = [1, 1]} : vector<2x128xf32> to vector<2x32xf32>
    %360 = arith.negf %359 : vector<2x32xf32>
    %361 = math.exp %360 : vector<2x32xf32>
    %cst_107 = arith.constant 1.000000e+00 : f32
    %362 = vector.broadcast %cst_107 : f32 to vector<2x32xf32>
    %363 = arith.addf %362, %361 : vector<2x32xf32>
    %364 = arith.divf %362, %363 : vector<2x32xf32>
    %365 = vector.extract_strided_slice %358 {offsets = [0, 32], sizes = [2, 32], strides = [1, 1]} : vector<2x128xf32> to vector<2x32xf32>
    %366 = arith.negf %365 : vector<2x32xf32>
    %367 = math.exp %366 : vector<2x32xf32>
    %cst_108 = arith.constant 1.000000e+00 : f32
    %368 = vector.broadcast %cst_108 : f32 to vector<2x32xf32>
    %369 = arith.addf %368, %367 : vector<2x32xf32>
    %370 = arith.divf %368, %369 : vector<2x32xf32>
    %371 = vector.extract_strided_slice %358 {offsets = [0, 64], sizes = [2, 32], strides = [1, 1]} : vector<2x128xf32> to vector<2x32xf32>
    %372 = math.tanh %371 : vector<2x32xf32>
    %373 = vector.extract_strided_slice %358 {offsets = [0, 96], sizes = [2, 32], strides = [1, 1]} : vector<2x128xf32> to vector<2x32xf32>
    %374 = arith.negf %373 : vector<2x32xf32>
    %375 = math.exp %374 : vector<2x32xf32>
    %cst_109 = arith.constant 1.000000e+00 : f32
    %376 = vector.broadcast %cst_109 : f32 to vector<2x32xf32>
    %377 = arith.addf %376, %375 : vector<2x32xf32>
    %378 = arith.divf %376, %377 : vector<2x32xf32>
    %379 = arith.mulf %370, %349 : vector<2x32xf32>
    %380 = arith.mulf %364, %372 : vector<2x32xf32>
    %381 = arith.addf %379, %380 : vector<2x32xf32>
    %382 = math.tanh %381 : vector<2x32xf32>
    %383 = arith.mulf %378, %382 : vector<2x32xf32>
    %c11_110 = arith.constant 11 : index
    %c0_111 = arith.constant 0 : index
    %c0_112 = arith.constant 0 : index
    %384 = vector.load %arg4[%c11_110, %c0_111, %c0_112] : memref<16x2x32xf32, #tpu.memory_space<vmem>>, vector<1x2x32xf32>
    %385 = vector.shape_cast %384 : vector<1x2x32xf32> to vector<2x32xf32>
    %386 = vector.shape_cast %383 : vector<2x32xf32> to vector<1x2x32xf32>
    tpu.vector_store %arg4[%c11_110, %c0_111, %c0_112], %386 {strides = array<i32>} : memref<16x2x32xf32, #tpu.memory_space<vmem>>, vector<1x2x32xf32>,
    %c12 = arith.constant 12 : index
    %c0_113 = arith.constant 0 : index
    %c0_114 = arith.constant 0 : index
    %387 = vector.load %arg0[%c12, %c0_113, %c0_114] : memref<16x2x128xf32, #tpu.memory_space<vmem>>, vector<1x2x128xf32>
    %388 = vector.shape_cast %387 : vector<1x2x128xf32> to vector<2x128xf32>
    %cst_115 = arith.constant dense<0.000000e+00> : vector<2x128xf32>
    %389 = tpu.matmul %383, %0, %cst_115 {dimension_numbers = #tpu.dot_dimension_numbers<[1], [0], [0], [1], [0, 0, 1, 1], [], []>} : vector<2x32xf32>, vector<32x128xf32>, vector<2x128xf32> -> vector<2x128xf32>
    %390 = arith.addf %388, %389 : vector<2x128xf32>
    %391 = vector.extract_strided_slice %390 {offsets = [0, 0], sizes = [2, 32], strides = [1, 1]} : vector<2x128xf32> to vector<2x32xf32>
    %392 = arith.negf %391 : vector<2x32xf32>
    %393 = math.exp %392 : vector<2x32xf32>
    %cst_116 = arith.constant 1.000000e+00 : f32
    %394 = vector.broadcast %cst_116 : f32 to vector<2x32xf32>
    %395 = arith.addf %394, %393 : vector<2x32xf32>
    %396 = arith.divf %394, %395 : vector<2x32xf32>
    %397 = vector.extract_strided_slice %390 {offsets = [0, 32], sizes = [2, 32], strides = [1, 1]} : vector<2x128xf32> to vector<2x32xf32>
    %398 = arith.negf %397 : vector<2x32xf32>
    %399 = math.exp %398 : vector<2x32xf32>
    %cst_117 = arith.constant 1.000000e+00 : f32
    %400 = vector.broadcast %cst_117 : f32 to vector<2x32xf32>
    %401 = arith.addf %400, %399 : vector<2x32xf32>
    %402 = arith.divf %400, %401 : vector<2x32xf32>
    %403 = vector.extract_strided_slice %390 {offsets = [0, 64], sizes = [2, 32], strides = [1, 1]} : vector<2x128xf32> to vector<2x32xf32>
    %404 = math.tanh %403 : vector<2x32xf32>
    %405 = vector.extract_strided_slice %390 {offsets = [0, 96], sizes = [2, 32], strides = [1, 1]} : vector<2x128xf32> to vector<2x32xf32>
    %406 = arith.negf %405 : vector<2x32xf32>
    %407 = math.exp %406 : vector<2x32xf32>
    %cst_118 = arith.constant 1.000000e+00 : f32
    %408 = vector.broadcast %cst_118 : f32 to vector<2x32xf32>
    %409 = arith.addf %408, %407 : vector<2x32xf32>
    %410 = arith.divf %408, %409 : vector<2x32xf32>
    %411 = arith.mulf %402, %381 : vector<2x32xf32>
    %412 = arith.mulf %396, %404 : vector<2x32xf32>
    %413 = arith.addf %411, %412 : vector<2x32xf32>
    %414 = math.tanh %413 : vector<2x32xf32>
    %415 = arith.mulf %410, %414 : vector<2x32xf32>
    %c12_119 = arith.constant 12 : index
    %c0_120 = arith.constant 0 : index
    %c0_121 = arith.constant 0 : index
    %416 = vector.load %arg4[%c12_119, %c0_120, %c0_121] : memref<16x2x32xf32, #tpu.memory_space<vmem>>, vector<1x2x32xf32>
    %417 = vector.shape_cast %416 : vector<1x2x32xf32> to vector<2x32xf32>
    %418 = vector.shape_cast %415 : vector<2x32xf32> to vector<1x2x32xf32>
    tpu.vector_store %arg4[%c12_119, %c0_120, %c0_121], %418 {strides = array<i32>} : memref<16x2x32xf32, #tpu.memory_space<vmem>>, vector<1x2x32xf32>,
    %c13 = arith.constant 13 : index
    %c0_122 = arith.constant 0 : index
    %c0_123 = arith.constant 0 : index
    %419 = vector.load %arg0[%c13, %c0_122, %c0_123] : memref<16x2x128xf32, #tpu.memory_space<vmem>>, vector<1x2x128xf32>
    %420 = vector.shape_cast %419 : vector<1x2x128xf32> to vector<2x128xf32>
    %cst_124 = arith.constant dense<0.000000e+00> : vector<2x128xf32>
    %421 = tpu.matmul %415, %0, %cst_124 {dimension_numbers = #tpu.dot_dimension_numbers<[1], [0], [0], [1], [0, 0, 1, 1], [], []>} : vector<2x32xf32>, vector<32x128xf32>, vector<2x128xf32> -> vector<2x128xf32>
    %422 = arith.addf %420, %421 : vector<2x128xf32>
    %423 = vector.extract_strided_slice %422 {offsets = [0, 0], sizes = [2, 32], strides = [1, 1]} : vector<2x128xf32> to vector<2x32xf32>
    %424 = arith.negf %423 : vector<2x32xf32>
    %425 = math.exp %424 : vector<2x32xf32>
    %cst_125 = arith.constant 1.000000e+00 : f32
    %426 = vector.broadcast %cst_125 : f32 to vector<2x32xf32>
    %427 = arith.addf %426, %425 : vector<2x32xf32>
    %428 = arith.divf %426, %427 : vector<2x32xf32>
    %429 = vector.extract_strided_slice %422 {offsets = [0, 32], sizes = [2, 32], strides = [1, 1]} : vector<2x128xf32> to vector<2x32xf32>
    %430 = arith.negf %429 : vector<2x32xf32>
    %431 = math.exp %430 : vector<2x32xf32>
    %cst_126 = arith.constant 1.000000e+00 : f32
    %432 = vector.broadcast %cst_126 : f32 to vector<2x32xf32>
    %433 = arith.addf %432, %431 : vector<2x32xf32>
    %434 = arith.divf %432, %433 : vector<2x32xf32>
    %435 = vector.extract_strided_slice %422 {offsets = [0, 64], sizes = [2, 32], strides = [1, 1]} : vector<2x128xf32> to vector<2x32xf32>
    %436 = math.tanh %435 : vector<2x32xf32>
    %437 = vector.extract_strided_slice %422 {offsets = [0, 96], sizes = [2, 32], strides = [1, 1]} : vector<2x128xf32> to vector<2x32xf32>
    %438 = arith.negf %437 : vector<2x32xf32>
    %439 = math.exp %438 : vector<2x32xf32>
    %cst_127 = arith.constant 1.000000e+00 : f32
    %440 = vector.broadcast %cst_127 : f32 to vector<2x32xf32>
    %441 = arith.addf %440, %439 : vector<2x32xf32>
    %442 = arith.divf %440, %441 : vector<2x32xf32>
    %443 = arith.mulf %434, %413 : vector<2x32xf32>
    %444 = arith.mulf %428, %436 : vector<2x32xf32>
    %445 = arith.addf %443, %444 : vector<2x32xf32>
    %446 = math.tanh %445 : vector<2x32xf32>
    %447 = arith.mulf %442, %446 : vector<2x32xf32>
    %c13_128 = arith.constant 13 : index
    %c0_129 = arith.constant 0 : index
    %c0_130 = arith.constant 0 : index
    %448 = vector.load %arg4[%c13_128, %c0_129, %c0_130] : memref<16x2x32xf32, #tpu.memory_space<vmem>>, vector<1x2x32xf32>
    %449 = vector.shape_cast %448 : vector<1x2x32xf32> to vector<2x32xf32>
    %450 = vector.shape_cast %447 : vector<2x32xf32> to vector<1x2x32xf32>
    tpu.vector_store %arg4[%c13_128, %c0_129, %c0_130], %450 {strides = array<i32>} : memref<16x2x32xf32, #tpu.memory_space<vmem>>, vector<1x2x32xf32>,
    %c14 = arith.constant 14 : index
    %c0_131 = arith.constant 0 : index
    %c0_132 = arith.constant 0 : index
    %451 = vector.load %arg0[%c14, %c0_131, %c0_132] : memref<16x2x128xf32, #tpu.memory_space<vmem>>, vector<1x2x128xf32>
    %452 = vector.shape_cast %451 : vector<1x2x128xf32> to vector<2x128xf32>
    %cst_133 = arith.constant dense<0.000000e+00> : vector<2x128xf32>
    %453 = tpu.matmul %447, %0, %cst_133 {dimension_numbers = #tpu.dot_dimension_numbers<[1], [0], [0], [1], [0, 0, 1, 1], [], []>} : vector<2x32xf32>, vector<32x128xf32>, vector<2x128xf32> -> vector<2x128xf32>
    %454 = arith.addf %452, %453 : vector<2x128xf32>
    %455 = vector.extract_strided_slice %454 {offsets = [0, 0], sizes = [2, 32], strides = [1, 1]} : vector<2x128xf32> to vector<2x32xf32>
    %456 = arith.negf %455 : vector<2x32xf32>
    %457 = math.exp %456 : vector<2x32xf32>
    %cst_134 = arith.constant 1.000000e+00 : f32
    %458 = vector.broadcast %cst_134 : f32 to vector<2x32xf32>
    %459 = arith.addf %458, %457 : vector<2x32xf32>
    %460 = arith.divf %458, %459 : vector<2x32xf32>
    %461 = vector.extract_strided_slice %454 {offsets = [0, 32], sizes = [2, 32], strides = [1, 1]} : vector<2x128xf32> to vector<2x32xf32>
    %462 = arith.negf %461 : vector<2x32xf32>
    %463 = math.exp %462 : vector<2x32xf32>
    %cst_135 = arith.constant 1.000000e+00 : f32
    %464 = vector.broadcast %cst_135 : f32 to vector<2x32xf32>
    %465 = arith.addf %464, %463 : vector<2x32xf32>
    %466 = arith.divf %464, %465 : vector<2x32xf32>
    %467 = vector.extract_strided_slice %454 {offsets = [0, 64], sizes = [2, 32], strides = [1, 1]} : vector<2x128xf32> to vector<2x32xf32>
    %468 = math.tanh %467 : vector<2x32xf32>
    %469 = vector.extract_strided_slice %454 {offsets = [0, 96], sizes = [2, 32], strides = [1, 1]} : vector<2x128xf32> to vector<2x32xf32>
    %470 = arith.negf %469 : vector<2x32xf32>
    %471 = math.exp %470 : vector<2x32xf32>
    %cst_136 = arith.constant 1.000000e+00 : f32
    %472 = vector.broadcast %cst_136 : f32 to vector<2x32xf32>
    %473 = arith.addf %472, %471 : vector<2x32xf32>
    %474 = arith.divf %472, %473 : vector<2x32xf32>
    %475 = arith.mulf %466, %445 : vector<2x32xf32>
    %476 = arith.mulf %460, %468 : vector<2x32xf32>
    %477 = arith.addf %475, %476 : vector<2x32xf32>
    %478 = math.tanh %477 : vector<2x32xf32>
    %479 = arith.mulf %474, %478 : vector<2x32xf32>
    %c14_137 = arith.constant 14 : index
    %c0_138 = arith.constant 0 : index
    %c0_139 = arith.constant 0 : index
    %480 = vector.load %arg4[%c14_137, %c0_138, %c0_139] : memref<16x2x32xf32, #tpu.memory_space<vmem>>, vector<1x2x32xf32>
    %481 = vector.shape_cast %480 : vector<1x2x32xf32> to vector<2x32xf32>
    %482 = vector.shape_cast %479 : vector<2x32xf32> to vector<1x2x32xf32>
    tpu.vector_store %arg4[%c14_137, %c0_138, %c0_139], %482 {strides = array<i32>} : memref<16x2x32xf32, #tpu.memory_space<vmem>>, vector<1x2x32xf32>,
    %c15 = arith.constant 15 : index
    %c0_140 = arith.constant 0 : index
    %c0_141 = arith.constant 0 : index
    %483 = vector.load %arg0[%c15, %c0_140, %c0_141] : memref<16x2x128xf32, #tpu.memory_space<vmem>>, vector<1x2x128xf32>
    %484 = vector.shape_cast %483 : vector<1x2x128xf32> to vector<2x128xf32>
    %cst_142 = arith.constant dense<0.000000e+00> : vector<2x128xf32>
    %485 = tpu.matmul %479, %0, %cst_142 {dimension_numbers = #tpu.dot_dimension_numbers<[1], [0], [0], [1], [0, 0, 1, 1], [], []>} : vector<2x32xf32>, vector<32x128xf32>, vector<2x128xf32> -> vector<2x128xf32>
    %486 = arith.addf %484, %485 : vector<2x128xf32>
    %487 = vector.extract_strided_slice %486 {offsets = [0, 0], sizes = [2, 32], strides = [1, 1]} : vector<2x128xf32> to vector<2x32xf32>
    %488 = arith.negf %487 : vector<2x32xf32>
    %489 = math.exp %488 : vector<2x32xf32>
    %cst_143 = arith.constant 1.000000e+00 : f32
    %490 = vector.broadcast %cst_143 : f32 to vector<2x32xf32>
    %491 = arith.addf %490, %489 : vector<2x32xf32>
    %492 = arith.divf %490, %491 : vector<2x32xf32>
    %493 = vector.extract_strided_slice %486 {offsets = [0, 32], sizes = [2, 32], strides = [1, 1]} : vector<2x128xf32> to vector<2x32xf32>
    %494 = arith.negf %493 : vector<2x32xf32>
    %495 = math.exp %494 : vector<2x32xf32>
    %cst_144 = arith.constant 1.000000e+00 : f32
    %496 = vector.broadcast %cst_144 : f32 to vector<2x32xf32>
    %497 = arith.addf %496, %495 : vector<2x32xf32>
    %498 = arith.divf %496, %497 : vector<2x32xf32>
    %499 = vector.extract_strided_slice %486 {offsets = [0, 64], sizes = [2, 32], strides = [1, 1]} : vector<2x128xf32> to vector<2x32xf32>
    %500 = math.tanh %499 : vector<2x32xf32>
    %501 = vector.extract_strided_slice %486 {offsets = [0, 96], sizes = [2, 32], strides = [1, 1]} : vector<2x128xf32> to vector<2x32xf32>
    %502 = arith.negf %501 : vector<2x32xf32>
    %503 = math.exp %502 : vector<2x32xf32>
    %cst_145 = arith.constant 1.000000e+00 : f32
    %504 = vector.broadcast %cst_145 : f32 to vector<2x32xf32>
    %505 = arith.addf %504, %503 : vector<2x32xf32>
    %506 = arith.divf %504, %505 : vector<2x32xf32>
    %507 = arith.mulf %498, %477 : vector<2x32xf32>
    %508 = arith.mulf %492, %500 : vector<2x32xf32>
    %509 = arith.addf %507, %508 : vector<2x32xf32>
    %510 = math.tanh %509 : vector<2x32xf32>
    %511 = arith.mulf %506, %510 : vector<2x32xf32>
    %c15_146 = arith.constant 15 : index
    %c0_147 = arith.constant 0 : index
    %c0_148 = arith.constant 0 : index
    %512 = vector.load %arg4[%c15_146, %c0_147, %c0_148] : memref<16x2x32xf32, #tpu.memory_space<vmem>>, vector<1x2x32xf32>
    %513 = vector.shape_cast %512 : vector<1x2x32xf32> to vector<2x32xf32>
    %514 = vector.shape_cast %511 : vector<2x32xf32> to vector<1x2x32xf32>
    tpu.vector_store %arg4[%c15_146, %c0_147, %c0_148], %514 {strides = array<i32>} : memref<16x2x32xf32, #tpu.memory_space<vmem>>, vector<1x2x32xf32>,
    %c0_149 = arith.constant 0 : index
    %c0_150 = arith.constant 0 : index
    %515 = vector.load %arg5[%c0_149, %c0_150] : memref<2x32xf32, #tpu.memory_space<vmem>>, vector<2x32xf32>
    tpu.vector_store %arg5[%c0_149, %c0_150], %511 {strides = array<i32>} : memref<2x32xf32, #tpu.memory_space<vmem>>, vector<2x32xf32>,
    %c0_151 = arith.constant 0 : index
    %c0_152 = arith.constant 0 : index
    %516 = vector.load %arg6[%c0_151, %c0_152] : memref<2x32xf32, #tpu.memory_space<vmem>>, vector<2x32xf32>
    tpu.vector_store %arg6[%c0_151, %c0_152], %509 {strides = array<i32>} : memref<2x32xf32, #tpu.memory_space<vmem>>, vector<2x32xf32>,
    return
  }
}

</mosaic_0001>

<llo_original>
// kernel: lstm_pallas.1
$region0: #{lstm_pallas.1}
  #allocation0 [shape = 'u32[]', space=smem, size = 0x4, offset = 0x4, fixed_abs, tag = 'smem constant byte address 0x4 - core index']
  #allocation1 [shape = 'u32[72,128]{1,0:T(1,128)}', space=vmem, size = 0x9000, scoped, tag = 'internal scratch']
  %s0 = inlined_call_operand.vmem [shape: f32[16,2,128], index: 0, kind: input, shape index: {}]
  %s1 = inlined_call_operand.vmem [shape: f32[32,128], index: 1, kind: input, shape index: {}]
  %s2 = inlined_call_operand.vmem [shape: f32[2,32], index: 2, kind: input, shape index: {}]
  %s3 = inlined_call_operand.vmem [shape: f32[2,32], index: 3, kind: input, shape index: {}]
  %s4 = inlined_call_operand.hbm [shape: f32[16,2,32], index: 4, kind: output, shape index: {0}]
  %s5 = inlined_call_operand.hbm [shape: f32[2,32], index: 5, kind: output, shape index: {1}]
  %s6 = inlined_call_operand.hbm [shape: f32[2,32], index: 6, kind: output, shape index: {2}]
  %7 = xla_tuple %s4, %s5, %s6
  %s8 = sld [smem:[#allocation0]]
  $region42: #{lstm_pallas.1} parent=0
    _
  %s10 = ssub.s32 1, %s8
  %s11 = scalar_select 0, %s10, %s8
  $region1: #{lstm_pallas.1} parent=0
    #allocation2 [shape = 'u8[16384]{0}', space=vmem, size = 0x4000, scoped, tag = 'output window, operand 0, single buffered']
    #allocation3 [shape = 's32[1]{0}', space=sflag, size = 0x4, scoped, tag = 'scoped memory for lstm_pallas.1']
    #allocation4 [shape = 'u8[1024]{0}', space=vmem, size = 0x400, scoped, tag = 'output window, operand 1, single buffered']
    #allocation5 [shape = 's32[1]{0}', space=sflag, size = 0x4, scoped, tag = 'scoped memory for lstm_pallas.1']
    #allocation6 [shape = 'u8[1024]{0}', space=vmem, size = 0x400, scoped, tag = 'output window, operand 2, single buffered']
    %12 = vsyncpa [#allocation3], 0
    %13 = vsyncpa [#allocation5], 0
    // Predicated region
    $region2: #{lstm_pallas.1} parent=1 // pred_check
      _
    $region3: #{lstm_pallas.1} parent=1 // pred_check_branch
      %15 = sbr.rel (0) target = $region5
    $region4: #{lstm_pallas.1} parent=1 // pred_region
      _
    $region5: #{lstm_pallas.1} parent=1 // pred_fallthru
      _
    // Predicated region
    $region6: #{lstm_pallas.1} parent=1 // pred_check
      _
    $region7: #{lstm_pallas.1} parent=1 // pred_check_branch
      %17 = sbr.rel (0) target = $region9
    $region8: #{lstm_pallas.1} parent=1 // pred_region
      _
    $region9: #{lstm_pallas.1} parent=1 // pred_fallthru
      _
    // Predicated region
    $region10: #{lstm_pallas.1} parent=1 // pred_check
      _
    $region11: #{lstm_pallas.1} parent=1 // pred_check_branch
      %19 = sbr.rel (0) target = $region13
    $region12: #{lstm_pallas.1} parent=1 // pred_region
      _
    $region13: #{lstm_pallas.1} parent=1 // pred_fallthru
      _
    // Predicated region
    $region14: #{lstm_pallas.1} parent=1 // pred_check
      _
    $region15: #{lstm_pallas.1} parent=1 // pred_check_branch
      %21 = sbr.rel (0) target = $region17
    $region16: #{lstm_pallas.1} parent=1 // pred_region
      _
    $region17: #{lstm_pallas.1} parent=1 // pred_fallthru
      _
    %v22 = vld [vmem:[%s1] sm:$0xff]
    %v23 = vld [vmem:[%s1 + $0x8] sm:$0xff]
    %v24 = vld [vmem:[%s1 + $0x10] sm:$0xff]
    %v25 = vld [vmem:[%s1 + $0x18] sm:$0xff]
    %v26 = vld [vmem:[%s2] sm:$0x3]
    %v27 = vld [vmem:[%s3] sm:$0x3]
    %v28 = vld [vmem:[%s0] sm:$0x3]
    %vm29 = vcmask 261120
    %v31 = vsel %vm29, %v26, 0
    %33 = vmatpush.msra.mxu0 0.0
    %34 = vmatpush.msra.mxu0 0.0
    %35 = vmatpush.msra.mxu0 0.0
    %36 = vmatpush.msra.mxu0 0.0
    %37 = vmatpush.msra.mxu0 0.0
    %38 = vmatpush.msra.mxu0 0.0
    %39 = vmatpush.msra.mxu0 0.0
    %40 = vmatpush.msra.mxu0 0.0
    %41 = vmatpush.msra.mxu0 0.0
    %42 = vmatpush.msra.mxu0 0.0
    %43 = vmatpush.msra.mxu0 0.0
    %44 = vmatpush.msra.mxu0 0.0
    %45 = vmatpush.msra.mxu0 %v25
    %46 = vmatpush.msra.mxu0 %v24
    %47 = vmatpush.msra.mxu0 %v23
    %48 = vmatpush.msra.mxu0 %v22
    %49 = vmatmul.f32.gmra.mxu0 %v31
    %v50 = vpop.f32.mrf.mxu0
    %v51 = vadd.f32 0.0, %v50
    %52 = vdwg.mxu0
    %v53 = vadd.f32 %v28, %v51
    %v54 = vxor.u32 %v53, 2147483648
    %v55 = vmul.f32 %v54, 1.442695
    %v56 = vpow.pop %v55
    %v57 = vadd.f32 %v56, 1.0
    %v58 = vrcp.pop %v57
    %v59 = vmul.f32 %v57, %v58
    %v60 = vsub.f32 1.0, %v59
    %v61 = vmul.f32 %v58, %v60
    %v62 = vadd.f32 %v58, %v61
    %vm63 = vweird.f32 %v57
    %vm64 = vweird.f32 %v58
    %vm65 = vmor %vm63, %vm64
    %v66 = vsel %vm65, %v58, %v62
    %v67 = vand.u32 2147483647, %v57
    %vm68 = vcmp.eq.f32.partialorder %v67, 8.507059e+37
    %v69 = vand.u32 %v57, 2147483648
    %v70 = vor.u32 1.1754944e-38, %v69
    %v71 = vsel %vm68, %v70, %v66
    %v72 = vmul.f32 1.0, %v71
    %v73 = vtanh.pop %v53
    %75 = vrot.lane.b32.xlu0 %v27, 32
    %v76 = vpop.permute.xlu0 %75
    %v78 = vmul.f32 %v72, %v76
    %80 = vrot.lane.b32.xlu0 %v73, 64
    %v81 = vpop.permute.xlu0 %80
    %v83 = vmul.f32 %v72, %v81
    %85 = vrot.lane.b32.xlu0 %v83, 32
    %v86 = vpop.permute.xlu0 %85
    %v88 = vadd.f32 %v78, %v86
    %v89 = vtanh.pop %v88
    %91 = vrot.lane.b32.xlu0 %v89, 64
    %v92 = vpop.permute.xlu0 %91
    %v94 = vmul.f32 %v72, %v92
    %96 = vrot.lane.b32.xlu0 %v94, 32
    %v97 = vpop.permute.xlu0 %96
    %vm99 = vcmask 254976
    %100 = vst.msk [vmem:[#allocation2] sm:$0x3] %vm99, %v97
    %s101 = scalar_lea.vmem %s0, 2
    %v102 = vld [vmem:[%s101] sm:$0x3]
    %v103 = vsel %vm29, %v97, 0
    %105 = vmatpush.msra.mxu0 0.0
    %106 = vmatpush.msra.mxu0 0.0
    %107 = vmatpush.msra.mxu0 0.0
    %108 = vmatpush.msra.mxu0 0.0
    %109 = vmatpush.msra.mxu0 0.0
    %110 = vmatpush.msra.mxu0 0.0
    %111 = vmatpush.msra.mxu0 0.0
    %112 = vmatpush.msra.mxu0 0.0
    %113 = vmatpush.msra.mxu0 0.0
    %114 = vmatpush.msra.mxu0 0.0
    %115 = vmatpush.msra.mxu0 0.0
    %116 = vmatpush.msra.mxu0 0.0
    %117 = vmatpush.msra.mxu0 %v25
    %118 = vmatpush.msra.mxu0 %v24
    %119 = vmatpush.msra.mxu0 %v23
    %120 = vmatpush.msra.mxu0 %v22
    %121 = vmatmul.f32.gmra.mxu0 %v103
    %v122 = vpop.f32.mrf.mxu0
    %v123 = vadd.f32 0.0, %v122
    %124 = vdwg.mxu0
    %v125 = vadd.f32 %v102, %v123
    %v126 = vxor.u32 %v125, 2147483648
    %v127 = vmul.f32 %v126, 1.442695
    %v128 = vpow.pop %v127
    %v129 = vadd.f32 %v128, 1.0
    %v130 = vrcp.pop %v129
    %v131 = vmul.f32 %v129, %v130
    %v132 = vsub.f32 1.0, %v131
    %v133 = vmul.f32 %v130, %v132
    %v134 = vadd.f32 %v130, %v133
    %vm135 = vweird.f32 %v129
    %vm136 = vweird.f32 %v130
    %vm137 = vmor %vm135, %vm136
    %v138 = vsel %vm137, %v130, %v134
    %v139 = vand.u32 2147483647, %v129
    %vm140 = vcmp.eq.f32.partialorder %v139, 8.507059e+37
    %v141 = vand.u32 %v129, 2147483648
    %v142 = vor.u32 1.1754944e-38, %v141
    %v143 = vsel %vm140, %v142, %v138
    %v144 = vmul.f32 1.0, %v143
    %v145 = vtanh.pop %v125
    %v146 = vmul.f32 %v144, %v88
    %148 = vrot.lane.b32.xlu0 %v145, 64
    %v149 = vpop.permute.xlu0 %148
    %v151 = vmul.f32 %v144, %v149
    %153 = vrot.lane.b32.xlu0 %v151, 32
    %v154 = vpop.permute.xlu0 %153
    %v156 = vadd.f32 %v146, %v154
    %v157 = vtanh.pop %v156
    %159 = vrot.lane.b32.xlu0 %v157, 64
    %v160 = vpop.permute.xlu0 %159
    %v162 = vmul.f32 %v144, %v160
    %164 = vrot.lane.b32.xlu0 %v162, 32
    %v165 = vpop.permute.xlu0 %164
    %s167 = scalar_lea.vmem [#allocation2], 2
    %168 = vst.msk [vmem:[%s167] sm:$0x3] %vm99, %v165
    %s169 = scalar_lea.vmem %s0, 4
    %v170 = vld [vmem:[%s169] sm:$0x3]
    %v171 = vsel %vm29, %v165, 0
    %173 = vmatpush.msra.mxu0 0.0
    %174 = vmatpush.msra.mxu0 0.0
    %175 = vmatpush.msra.mxu0 0.0
    %176 = vmatpush.msra.mxu0 0.0
    %177 = vmatpush.msra.mxu0 0.0
    %178 = vmatpush.msra.mxu0 0.0
    %179 = vmatpush.msra.mxu0 0.0
    %180 = vmatpush.msra.mxu0 0.0
    %181 = vmatpush.msra.mxu0 0.0
    %182 = vmatpush.msra.mxu0 0.0
    %183 = vmatpush.msra.mxu0 0.0
    %184 = vmatpush.msra.mxu0 0.0
    %185 = vmatpush.msra.mxu0 %v25
    %186 = vmatpush.msra.mxu0 %v24
    %187 = vmatpush.msra.mxu0 %v23
    %188 = vmatpush.msra.mxu0 %v22
    %189 = vmatmul.f32.gmra.mxu0 %v171
    %v190 = vpop.f32.mrf.mxu0
    %v191 = vadd.f32 0.0, %v190
    %192 = vdwg.mxu0
    %v193 = vadd.f32 %v170, %v191
    %v194 = vxor.u32 %v193, 2147483648
    %v195 = vmul.f32 %v194, 1.442695
    %v196 = vpow.pop %v195
    %v197 = vadd.f32 %v196, 1.0
    %v198 = vrcp.pop %v197
    %v199 = vmul.f32 %v197, %v198
    %v200 = vsub.f32 1.0, %v199
    %v201 = vmul.f32 %v198, %v200
    %v202 = vadd.f32 %v198, %v201
    %vm203 = vweird.f32 %v197
    %vm204 = vweird.f32 %v198
    %vm205 = vmor %vm203, %vm204
    %v206 = vsel %vm205, %v198, %v202
    %v207 = vand.u32 2147483647, %v197
    %vm208 = vcmp.eq.f32.partialorder %v207, 8.507059e+37
    %v209 = vand.u32 %v197, 2147483648
    %v210 = vor.u32 1.1754944e-38, %v209
    %v211 = vsel %vm208, %v210, %v206
    %v212 = vmul.f32 1.0, %v211
    %v213 = vtanh.pop %v193
    %v214 = vmul.f32 %v212, %v156
    %216 = vrot.lane.b32.xlu0 %v213, 64
    %v217 = vpop.permute.xlu0 %216
    %v219 = vmul.f32 %v212, %v217
    %221 = vrot.lane.b32.xlu0 %v219, 32
    %v222 = vpop.permute.xlu0 %221
    %v224 = vadd.f32 %v214, %v222
    %v225 = vtanh.pop %v224
    %227 = vrot.lane.b32.xlu0 %v225, 64
    %v228 = vpop.permute.xlu0 %227
    %v230 = vmul.f32 %v212, %v228
    %232 = vrot.lane.b32.xlu0 %v230, 32
    %v233 = vpop.permute.xlu0 %232
    %s235 = scalar_lea.vmem [#allocation2], 4
    %236 = vst.msk [vmem:[%s235] sm:$0x3] %vm99, %v233
    %s237 = scalar_lea.vmem %s0, 6
    %v238 = vld [vmem:[%s237] sm:$0x3]
    %v239 = vsel %vm29, %v233, 0
    %241 = vmatpush.msra.mxu0 0.0
    %242 = vmatpush.msra.mxu0 0.0
    %243 = vmatpush.msra.mxu0 0.0
    %244 = vmatpush.msra.mxu0 0.0
    %245 = vmatpush.msra.mxu0 0.0
    %246 = vmatpush.msra.mxu0 0.0
    %247 = vmatpush.msra.mxu0 0.0
    %248 = vmatpush.msra.mxu0 0.0
    %249 = vmatpush.msra.mxu0 0.0
    %250 = vmatpush.msra.mxu0 0.0
    %251 = vmatpush.msra.mxu0 0.0
    %252 = vmatpush.msra.mxu0 0.0
    %253 = vmatpush.msra.mxu0 %v25
    %254 = vmatpush.msra.mxu0 %v24
    %255 = vmatpush.msra.mxu0 %v23
    %256 = vmatpush.msra.mxu0 %v22
    %257 = vmatmul.f32.gmra.mxu0 %v239
    %v258 = vpop.f32.mrf.mxu0
    %v259 = vadd.f32 0.0, %v258
    %260 = vdwg.mxu0
    %v261 = vadd.f32 %v238, %v259
    %v262 = vxor.u32 %v261, 2147483648
    %v263 = vmul.f32 %v262, 1.442695
    %v264 = vpow.pop %v263
    %v265 = vadd.f32 %v264, 1.0
    %v266 = vrcp.pop %v265
    %v267 = vmul.f32 %v265, %v266
    %v268 = vsub.f32 1.0, %v267
    %v269 = vmul.f32 %v266, %v268
    %v270 = vadd.f32 %v266, %v269
    %vm271 = vweird.f32 %v265
    %vm272 = vweird.f32 %v266
    %vm273 = vmor %vm271, %vm272
    %v274 = vsel %vm273, %v266, %v270
    %v275 = vand.u32 2147483647, %v265
    %vm276 = vcmp.eq.f32.partialorder %v275, 8.507059e+37
    %v277 = vand.u32 %v265, 2147483648
    %v278 = vor.u32 1.1754944e-38, %v277
    %v279 = vsel %vm276, %v278, %v274
    %v280 = vmul.f32 1.0, %v279
    %v281 = vtanh.pop %v261
    %v282 = vmul.f32 %v280, %v224
    %284 = vrot.lane.b32.xlu0 %v281, 64
    %v285 = vpop.permute.xlu0 %284
    %v287 = vmul.f32 %v280, %v285
    %289 = vrot.lane.b32.xlu0 %v287, 32
    %v290 = vpop.permute.xlu0 %289
    %v292 = vadd.f32 %v282, %v290
    %v293 = vtanh.pop %v292
    %295 = vrot.lane.b32.xlu0 %v293, 64
    %v296 = vpop.permute.xlu0 %295
    %v298 = vmul.f32 %v280, %v296
    %300 = vrot.lane.b32.xlu0 %v298, 32
    %v301 = vpop.permute.xlu0 %300
    %s303 = scalar_lea.vmem [#allocation2], 6
    %304 = vst.msk [vmem:[%s303] sm:$0x3] %vm99, %v301
    %s305 = scalar_lea.vmem %s0, 8
    %v306 = vld [vmem:[%s305] sm:$0x3]
    %v307 = vsel %vm29, %v301, 0
    %309 = vmatpush.msra.mxu0 0.0
    %310 = vmatpush.msra.mxu0 0.0
    %311 = vmatpush.msra.mxu0 0.0
    %312 = vmatpush.msra.mxu0 0.0
    %313 = vmatpush.msra.mxu0 0.0
    %314 = vmatpush.msra.mxu0 0.0
    %315 = vmatpush.msra.mxu0 0.0
    %316 = vmatpush.msra.mxu0 0.0
    %317 = vmatpush.msra.mxu0 0.0
    %318 = vmatpush.msra.mxu0 0.0
    %319 = vmatpush.msra.mxu0 0.0
    %320 = vmatpush.msra.mxu0 0.0
    %321 = vmatpush.msra.mxu0 %v25
    %322 = vmatpush.msra.mxu0 %v24
    %323 = vmatpush.msra.mxu0 %v23
    %324 = vmatpush.msra.mxu0 %v22
    %325 = vmatmul.f32.gmra.mxu0 %v307
    %v326 = vpop.f32.mrf.mxu0
    %v327 = vadd.f32 0.0, %v326
    %328 = vdwg.mxu0
    %v329 = vadd.f32 %v306, %v327
    %v330 = vxor.u32 %v329, 2147483648
    %v331 = vmul.f32 %v330, 1.442695
    %v332 = vpow.pop %v331
    %v333 = vadd.f32 %v332, 1.0
    %v334 = vrcp.pop %v333
    %v335 = vmul.f32 %v333, %v334
    %v336 = vsub.f32 1.0, %v335
    %v337 = vmul.f32 %v334, %v336
    %v338 = vadd.f32 %v334, %v337
    %vm339 = vweird.f32 %v333
    %vm340 = vweird.f32 %v334
    %vm341 = vmor %vm339, %vm340
    %v342 = vsel %vm341, %v334, %v338
    %v343 = vand.u32 2147483647, %v333
    %vm344 = vcmp.eq.f32.partialorder %v343, 8.507059e+37
    %v345 = vand.u32 %v333, 2147483648
    %v346 = vor.u32 1.1754944e-38, %v345
    %v347 = vsel %vm344, %v346, %v342
    %v348 = vmul.f32 1.0, %v347
    %v349 = vtanh.pop %v329
    %v350 = vmul.f32 %v348, %v292
    %352 = vrot.lane.b32.xlu0 %v349, 64
    %v353 = vpop.permute.xlu0 %352
    %v355 = vmul.f32 %v348, %v353
    %357 = vrot.lane.b32.xlu0 %v355, 32
    %v358 = vpop.permute.xlu0 %357
    %v360 = vadd.f32 %v350, %v358
    %v361 = vtanh.pop %v360
    %363 = vrot.lane.b32.xlu0 %v361, 64
    %v364 = vpop.permute.xlu0 %363
    %v366 = vmul.f32 %v348, %v364
    %368 = vrot.lane.b32.xlu0 %v366, 32
    %v369 = vpop.permute.xlu0 %368
    %s371 = scalar_lea.vmem [#allocation2], 8
    %372 = vst.msk [vmem:[%s371] sm:$0x3] %vm99, %v369
    %s373 = scalar_lea.vmem %s0, 10
    %v374 = vld [vmem:[%s373] sm:$0x3]
    %v375 = vsel %vm29, %v369, 0
    %377 = vmatpush.msra.mxu0 0.0
    %378 = vmatpush.msra.mxu0 0.0
    %379 = vmatpush.msra.mxu0 0.0
    %380 = vmatpush.msra.mxu0 0.0
    %381 = vmatpush.msra.mxu0 0.0
    %382 = vmatpush.msra.mxu0 0.0
    %383 = vmatpush.msra.mxu0 0.0
    %384 = vmatpush.msra.mxu0 0.0
    %385 = vmatpush.msra.mxu0 0.0
    %386 = vmatpush.msra.mxu0 0.0
    %387 = vmatpush.msra.mxu0 0.0
    %388 = vmatpush.msra.mxu0 0.0
    %389 = vmatpush.msra.mxu0 %v25
    %390 = vmatpush.msra.mxu0 %v24
    %391 = vmatpush.msra.mxu0 %v23
    %392 = vmatpush.msra.mxu0 %v22
    %393 = vmatmul.f32.gmra.mxu0 %v375
    %v394 = vpop.f32.mrf.mxu0
    %v395 = vadd.f32 0.0, %v394
    %396 = vdwg.mxu0
    %v397 = vadd.f32 %v374, %v395
    %v398 = vxor.u32 %v397, 2147483648
    %v399 = vmul.f32 %v398, 1.442695
    %v400 = vpow.pop %v399
    %v401 = vadd.f32 %v400, 1.0
    %v402 = vrcp.pop %v401
    %v403 = vmul.f32 %v401, %v402
    %v404 = vsub.f32 1.0, %v403
    %v405 = vmul.f32 %v402, %v404
    %v406 = vadd.f32 %v402, %v405
    %vm407 = vweird.f32 %v401
    %vm408 = vweird.f32 %v402
    %vm409 = vmor %vm407, %vm408
    %v410 = vsel %vm409, %v402, %v406
    %v411 = vand.u32 2147483647, %v401
    %vm412 = vcmp.eq.f32.partialorder %v411, 8.507059e+37
    %v413 = vand.u32 %v401, 2147483648
    %v414 = vor.u32 1.1754944e-38, %v413
    %v415 = vsel %vm412, %v414, %v410
    %v416 = vmul.f32 1.0, %v415
    %v417 = vtanh.pop %v397
    %v418 = vmul.f32 %v416, %v360
    %420 = vrot.lane.b32.xlu0 %v417, 64
    %v421 = vpop.permute.xlu0 %420
    %v423 = vmul.f32 %v416, %v421
    %425 = vrot.lane.b32.xlu0 %v423, 32
    %v426 = vpop.permute.xlu0 %425
    %v428 = vadd.f32 %v418, %v426
    %v429 = vtanh.pop %v428
    %431 = vrot.lane.b32.xlu0 %v429, 64
    %v432 = vpop.permute.xlu0 %431
    %v434 = vmul.f32 %v416, %v432
    %436 = vrot.lane.b32.xlu0 %v434, 32
    %v437 = vpop.permute.xlu0 %436
    %s439 = scalar_lea.vmem [#allocation2], 10
    %440 = vst.msk [vmem:[%s439] sm:$0x3] %vm99, %v437
    %s441 = scalar_lea.vmem %s0, 12
    %v442 = vld [vmem:[%s441] sm:$0x3]
    %v443 = vsel %vm29, %v437, 0
    %445 = vmatpush.msra.mxu0 0.0
    %446 = vmatpush.msra.mxu0 0.0
    %447 = vmatpush.msra.mxu0 0.0
    %448 = vmatpush.msra.mxu0 0.0
    %449 = vmatpush.msra.mxu0 0.0
    %450 = vmatpush.msra.mxu0 0.0
    %451 = vmatpush.msra.mxu0 0.0
    %452 = vmatpush.msra.mxu0 0.0
    %453 = vmatpush.msra.mxu0 0.0
    %454 = vmatpush.msra.mxu0 0.0
    %455 = vmatpush.msra.mxu0 0.0
    %456 = vmatpush.msra.mxu0 0.0
    %457 = vmatpush.msra.mxu0 %v25
    %458 = vmatpush.msra.mxu0 %v24
    %459 = vmatpush.msra.mxu0 %v23
    %460 = vmatpush.msra.mxu0 %v22
    %461 = vmatmul.f32.gmra.mxu0 %v443
    %v462 = vpop.f32.mrf.mxu0
    %v463 = vadd.f32 0.0, %v462
    %464 = vdwg.mxu0
    %v465 = vadd.f32 %v442, %v463
    %v466 = vxor.u32 %v465, 2147483648
    %v467 = vmul.f32 %v466, 1.442695
    %v468 = vpow.pop %v467
    %v469 = vadd.f32 %v468, 1.0
    %v470 = vrcp.pop %v469
    %v471 = vmul.f32 %v469, %v470
    %v472 = vsub.f32 1.0, %v471
    %v473 = vmul.f32 %v470, %v472
    %v474 = vadd.f32 %v470, %v473
    %vm475 = vweird.f32 %v469
    %vm476 = vweird.f32 %v470
    %vm477 = vmor %vm475, %vm476
    %v478 = vsel %vm477, %v470, %v474
    %v479 = vand.u32 2147483647, %v469
    %vm480 = vcmp.eq.f32.partialorder %v479, 8.507059e+37
    %v481 = vand.u32 %v469, 2147483648
    %v482 = vor.u32 1.1754944e-38, %v481
    %v483 = vsel %vm480, %v482, %v478
    %v484 = vmul.f32 1.0, %v483
    %v485 = vtanh.pop %v465
    %v486 = vmul.f32 %v484, %v428
    %488 = vrot.lane.b32.xlu0 %v485, 64
    %v489 = vpop.permute.xlu0 %488
    %v491 = vmul.f32 %v484, %v489
    %493 = vrot.lane.b32.xlu0 %v491, 32
    %v494 = vpop.permute.xlu0 %493
    %v496 = vadd.f32 %v486, %v494
    %v497 = vtanh.pop %v496
    %499 = vrot.lane.b32.xlu0 %v497, 64
    %v500 = vpop.permute.xlu0 %499
    %v502 = vmul.f32 %v484, %v500
    %504 = vrot.lane.b32.xlu0 %v502, 32
    %v505 = vpop.permute.xlu0 %504
    %s507 = scalar_lea.vmem [#allocation2], 12
    %508 = vst.msk [vmem:[%s507] sm:$0x3] %vm99, %v505
    %s509 = scalar_lea.vmem %s0, 14
    %v510 = vld [vmem:[%s509] sm:$0x3]
    %v511 = vsel %vm29, %v505, 0
    %513 = vmatpush.msra.mxu0 0.0
    %514 = vmatpush.msra.mxu0 0.0
    %515 = vmatpush.msra.mxu0 0.0
    %516 = vmatpush.msra.mxu0 0.0
    %517 = vmatpush.msra.mxu0 0.0
    %518 = vmatpush.msra.mxu0 0.0
    %519 = vmatpush.msra.mxu0 0.0
    %520 = vmatpush.msra.mxu0 0.0
    %521 = vmatpush.msra.mxu0 0.0
    %522 = vmatpush.msra.mxu0 0.0
    %523 = vmatpush.msra.mxu0 0.0
    %524 = vmatpush.msra.mxu0 0.0
    %525 = vmatpush.msra.mxu0 %v25
    %526 = vmatpush.msra.mxu0 %v24
    %527 = vmatpush.msra.mxu0 %v23
    %528 = vmatpush.msra.mxu0 %v22
    %529 = vmatmul.f32.gmra.mxu0 %v511
    %v530 = vpop.f32.mrf.mxu0
    %v531 = vadd.f32 0.0, %v530
    %532 = vdwg.mxu0
    %v533 = vadd.f32 %v510, %v531
    %v534 = vxor.u32 %v533, 2147483648
    %v535 = vmul.f32 %v534, 1.442695
    %v536 = vpow.pop %v535
    %v537 = vadd.f32 %v536, 1.0
    %v538 = vrcp.pop %v537
    %v539 = vmul.f32 %v537, %v538
    %v540 = vsub.f32 1.0, %v539
    %v541 = vmul.f32 %v538, %v540
    %v542 = vadd.f32 %v538, %v541
    %vm543 = vweird.f32 %v537
    %vm544 = vweird.f32 %v538
    %vm545 = vmor %vm543, %vm544
    %v546 = vsel %vm545, %v538, %v542
    %v547 = vand.u32 2147483647, %v537
    %vm548 = vcmp.eq.f32.partialorder %v547, 8.507059e+37
    %v549 = vand.u32 %v537, 2147483648
    %v550 = vor.u32 1.1754944e-38, %v549
    %v551 = vsel %vm548, %v550, %v546
    %v552 = vmul.f32 1.0, %v551
    %v553 = vtanh.pop %v533
    %v554 = vmul.f32 %v552, %v496
    %556 = vrot.lane.b32.xlu0 %v553, 64
    %v557 = vpop.permute.xlu0 %556
    %v559 = vmul.f32 %v552, %v557
    %561 = vrot.lane.b32.xlu0 %v559, 32
    %v562 = vpop.permute.xlu0 %561
    %v564 = vadd.f32 %v554, %v562
    %v565 = vtanh.pop %v564
    %567 = vrot.lane.b32.xlu0 %v565, 64
    %v568 = vpop.permute.xlu0 %567
    %v570 = vmul.f32 %v552, %v568
    %572 = vrot.lane.b32.xlu0 %v570, 32
    %v573 = vpop.permute.xlu0 %572
    %s575 = scalar_lea.vmem [#allocation2], 14
    %576 = vst.msk [vmem:[%s575] sm:$0x3] %vm99, %v573
    %s577 = scalar_lea.vmem %s0, 16
    %v578 = vld [vmem:[%s577] sm:$0x3]
    %v579 = vsel %vm29, %v573, 0
    %581 = vmatpush.msra.mxu0 0.0
    %582 = vmatpush.msra.mxu0 0.0
    %583 = vmatpush.msra.mxu0 0.0
    %584 = vmatpush.msra.mxu0 0.0
    %585 = vmatpush.msra.mxu0 0.0
    %586 = vmatpush.msra.mxu0 0.0
    %587 = vmatpush.msra.mxu0 0.0
    %588 = vmatpush.msra.mxu0 0.0
    %589 = vmatpush.msra.mxu0 0.0
    %590 = vmatpush.msra.mxu0 0.0
    %591 = vmatpush.msra.mxu0 0.0
    %592 = vmatpush.msra.mxu0 0.0
    %593 = vmatpush.msra.mxu0 %v25
    %594 = vmatpush.msra.mxu0 %v24
    %595 = vmatpush.msra.mxu0 %v23
    %596 = vmatpush.msra.mxu0 %v22
    %597 = vmatmul.f32.gmra.mxu0 %v579
    %v598 = vpop.f32.mrf.mxu0
    %v599 = vadd.f32 0.0, %v598
    %600 = vdwg.mxu0
    %v601 = vadd.f32 %v578, %v599
    %v602 = vxor.u32 %v601, 2147483648
    %v603 = vmul.f32 %v602, 1.442695
    %v604 = vpow.pop %v603
    %v605 = vadd.f32 %v604, 1.0
    %v606 = vrcp.pop %v605
    %v607 = vmul.f32 %v605, %v606
    %v608 = vsub.f32 1.0, %v607
    %v609 = vmul.f32 %v606, %v608
    %v610 = vadd.f32 %v606, %v609
    %vm611 = vweird.f32 %v605
    %vm612 = vweird.f32 %v606
    %vm613 = vmor %vm611, %vm612
    %v614 = vsel %vm613, %v606, %v610
    %v615 = vand.u32 2147483647, %v605
    %vm616 = vcmp.eq.f32.partialorder %v615, 8.507059e+37
    %v617 = vand.u32 %v605, 2147483648
    %v618 = vor.u32 1.1754944e-38, %v617
    %v619 = vsel %vm616, %v618, %v614
    %v620 = vmul.f32 1.0, %v619
    %v621 = vtanh.pop %v601
    %v622 = vmul.f32 %v620, %v564
    %624 = vrot.lane.b32.xlu0 %v621, 64
    %v625 = vpop.permute.xlu0 %624
    %v627 = vmul.f32 %v620, %v625
    %629 = vrot.lane.b32.xlu0 %v627, 32
    %v630 = vpop.permute.xlu0 %629
    %v632 = vadd.f32 %v622, %v630
    %v633 = vtanh.pop %v632
    %635 = vrot.lane.b32.xlu0 %v633, 64
    %v636 = vpop.permute.xlu0 %635
    %v638 = vmul.f32 %v620, %v636
    %640 = vrot.lane.b32.xlu0 %v638, 32
    %v641 = vpop.permute.xlu0 %640
    %s643 = scalar_lea.vmem [#allocation2], 16
    %644 = vst.msk [vmem:[%s643] sm:$0x3] %vm99, %v641
    %s645 = scalar_lea.vmem %s0, 18
    %v646 = vld [vmem:[%s645] sm:$0x3]
    %v647 = vsel %vm29, %v641, 0
    %649 = vmatpush.msra.mxu0 0.0
    %650 = vmatpush.msra.mxu0 0.0
    %651 = vmatpush.msra.mxu0 0.0
    %652 = vmatpush.msra.mxu0 0.0
    %653 = vmatpush.msra.mxu0 0.0
    %654 = vmatpush.msra.mxu0 0.0
    %655 = vmatpush.msra.mxu0 0.0
    %656 = vmatpush.msra.mxu0 0.0
    %657 = vmatpush.msra.mxu0 0.0
    %658 = vmatpush.msra.mxu0 0.0
    %659 = vmatpush.msra.mxu0 0.0
    %660 = vmatpush.msra.mxu0 0.0
    %661 = vmatpush.msra.mxu0 %v25
    %662 = vmatpush.msra.mxu0 %v24
    %663 = vmatpush.msra.mxu0 %v23
    %664 = vmatpush.msra.mxu0 %v22
    %665 = vmatmul.f32.gmra.mxu0 %v647
    %v666 = vpop.f32.mrf.mxu0
    %v667 = vadd.f32 0.0, %v666
    %668 = vdwg.mxu0
    %v669 = vadd.f32 %v646, %v667
    %v670 = vxor.u32 %v669, 2147483648
    %v671 = vmul.f32 %v670, 1.442695
    %v672 = vpow.pop %v671
    %v673 = vadd.f32 %v672, 1.0
    %v674 = vrcp.pop %v673
    %v675 = vmul.f32 %v673, %v674
    %v676 = vsub.f32 1.0, %v675
    %v677 = vmul.f32 %v674, %v676
    %v678 = vadd.f32 %v674, %v677
    %vm679 = vweird.f32 %v673
    %vm680 = vweird.f32 %v674
    %vm681 = vmor %vm679, %vm680
    %v682 = vsel %vm681, %v674, %v678
    %v683 = vand.u32 2147483647, %v673
    %vm684 = vcmp.eq.f32.partialorder %v683, 8.507059e+37
    %v685 = vand.u32 %v673, 2147483648
    %v686 = vor.u32 1.1754944e-38, %v685
    %v687 = vsel %vm684, %v686, %v682
    %v688 = vmul.f32 1.0, %v687
    %v689 = vtanh.pop %v669
    %v690 = vmul.f32 %v688, %v632
    %692 = vrot.lane.b32.xlu0 %v689, 64
    %v693 = vpop.permute.xlu0 %692
    %v695 = vmul.f32 %v688, %v693
    %697 = vrot.lane.b32.xlu0 %v695, 32
    %v698 = vpop.permute.xlu0 %697
    %v700 = vadd.f32 %v690, %v698
    %v701 = vtanh.pop %v700
    %703 = vrot.lane.b32.xlu0 %v701, 64
    %v704 = vpop.permute.xlu0 %703
    %v706 = vmul.f32 %v688, %v704
    %708 = vrot.lane.b32.xlu0 %v706, 32
    %v709 = vpop.permute.xlu0 %708
    %s711 = scalar_lea.vmem [#allocation2], 18
    %712 = vst.msk [vmem:[%s711] sm:$0x3] %vm99, %v709
    %s713 = scalar_lea.vmem %s0, 20
    %v714 = vld [vmem:[%s713] sm:$0x3]
    %v715 = vsel %vm29, %v709, 0
    %717 = vmatpush.msra.mxu0 0.0
    %718 = vmatpush.msra.mxu0 0.0
    %719 = vmatpush.msra.mxu0 0.0
    %720 = vmatpush.msra.mxu0 0.0
    %721 = vmatpush.msra.mxu0 0.0
    %722 = vmatpush.msra.mxu0 0.0
    %723 = vmatpush.msra.mxu0 0.0
    %724 = vmatpush.msra.mxu0 0.0
    %725 = vmatpush.msra.mxu0 0.0
    %726 = vmatpush.msra.mxu0 0.0
    %727 = vmatpush.msra.mxu0 0.0
    %728 = vmatpush.msra.mxu0 0.0
    %729 = vmatpush.msra.mxu0 %v25
    %730 = vmatpush.msra.mxu0 %v24
    %731 = vmatpush.msra.mxu0 %v23
    %732 = vmatpush.msra.mxu0 %v22
    %733 = vmatmul.f32.gmra.mxu0 %v715
    %v734 = vpop.f32.mrf.mxu0
    %v735 = vadd.f32 0.0, %v734
    %736 = vdwg.mxu0
    %v737 = vadd.f32 %v714, %v735
    %v738 = vxor.u32 %v737, 2147483648
    %v739 = vmul.f32 %v738, 1.442695
    %v740 = vpow.pop %v739
    %v741 = vadd.f32 %v740, 1.0
    %v742 = vrcp.pop %v741
    %v743 = vmul.f32 %v741, %v742
    %v744 = vsub.f32 1.0, %v743
    %v745 = vmul.f32 %v742, %v744
    %v746 = vadd.f32 %v742, %v745
    %vm747 = vweird.f32 %v741
    %vm748 = vweird.f32 %v742
    %vm749 = vmor %vm747, %vm748
    %v750 = vsel %vm749, %v742, %v746
    %v751 = vand.u32 2147483647, %v741
    %vm752 = vcmp.eq.f32.partialorder %v751, 8.507059e+37
    %v753 = vand.u32 %v741, 2147483648
    %v754 = vor.u32 1.1754944e-38, %v753
    %v755 = vsel %vm752, %v754, %v750
    %v756 = vmul.f32 1.0, %v755
    %v757 = vtanh.pop %v737
    %v758 = vmul.f32 %v756, %v700
    %760 = vrot.lane.b32.xlu0 %v757, 64
    %v761 = vpop.permute.xlu0 %760
    %v763 = vmul.f32 %v756, %v761
    %765 = vrot.lane.b32.xlu0 %v763, 32
    %v766 = vpop.permute.xlu0 %765
    %v768 = vadd.f32 %v758, %v766
    %v769 = vtanh.pop %v768
    %771 = vrot.lane.b32.xlu0 %v769, 64
    %v772 = vpop.permute.xlu0 %771
    %v774 = vmul.f32 %v756, %v772
    %776 = vrot.lane.b32.xlu0 %v774, 32
    %v777 = vpop.permute.xlu0 %776
    %s779 = scalar_lea.vmem [#allocation2], 20
    %780 = vst.msk [vmem:[%s779] sm:$0x3] %vm99, %v777
    %s781 = scalar_lea.vmem %s0, 22
    %v782 = vld [vmem:[%s781] sm:$0x3]
    %v783 = vsel %vm29, %v777, 0
    %785 = vmatpush.msra.mxu0 0.0
    %786 = vmatpush.msra.mxu0 0.0
    %787 = vmatpush.msra.mxu0 0.0
    %788 = vmatpush.msra.mxu0 0.0
    %789 = vmatpush.msra.mxu0 0.0
    %790 = vmatpush.msra.mxu0 0.0
    %791 = vmatpush.msra.mxu0 0.0
    %792 = vmatpush.msra.mxu0 0.0
    %793 = vmatpush.msra.mxu0 0.0
    %794 = vmatpush.msra.mxu0 0.0
    %795 = vmatpush.msra.mxu0 0.0
    %796 = vmatpush.msra.mxu0 0.0
    %797 = vmatpush.msra.mxu0 %v25
    %798 = vmatpush.msra.mxu0 %v24
    %799 = vmatpush.msra.mxu0 %v23
    %800 = vmatpush.msra.mxu0 %v22
    %801 = vmatmul.f32.gmra.mxu0 %v783
    %v802 = vpop.f32.mrf.mxu0
    %v803 = vadd.f32 0.0, %v802
    %804 = vdwg.mxu0
    %v805 = vadd.f32 %v782, %v803
    %v806 = vxor.u32 %v805, 2147483648
    %v807 = vmul.f32 %v806, 1.442695
    %v808 = vpow.pop %v807
    %v809 = vadd.f32 %v808, 1.0
    %v810 = vrcp.pop %v809
    %v811 = vmul.f32 %v809, %v810
    %v812 = vsub.f32 1.0, %v811
    %v813 = vmul.f32 %v810, %v812
    %v814 = vadd.f32 %v810, %v813
    %vm815 = vweird.f32 %v809
    %vm816 = vweird.f32 %v810
    %vm817 = vmor %vm815, %vm816
    %v818 = vsel %vm817, %v810, %v814
    %v819 = vand.u32 2147483647, %v809
    %vm820 = vcmp.eq.f32.partialorder %v819, 8.507059e+37
    %v821 = vand.u32 %v809, 2147483648
    %v822 = vor.u32 1.1754944e-38, %v821
    %v823 = vsel %vm820, %v822, %v818
    %v824 = vmul.f32 1.0, %v823
    %v825 = vtanh.pop %v805
    %v826 = vmul.f32 %v824, %v768
    %828 = vrot.lane.b32.xlu0 %v825, 64
    %v829 = vpop.permute.xlu0 %828
    %v831 = vmul.f32 %v824, %v829
    %833 = vrot.lane.b32.xlu0 %v831, 32
    %v834 = vpop.permute.xlu0 %833
    %v836 = vadd.f32 %v826, %v834
    %v837 = vtanh.pop %v836
    %839 = vrot.lane.b32.xlu0 %v837, 64
    %v840 = vpop.permute.xlu0 %839
    %v842 = vmul.f32 %v824, %v840
    %844 = vrot.lane.b32.xlu0 %v842, 32
    %v845 = vpop.permute.xlu0 %844
    %s847 = scalar_lea.vmem [#allocation2], 22
    %848 = vst.msk [vmem:[%s847] sm:$0x3] %vm99, %v845
    %s849 = scalar_lea.vmem %s0, 24
    %v850 = vld [vmem:[%s849] sm:$0x3]
    %v851 = vsel %vm29, %v845, 0
    %853 = vmatpush.msra.mxu0 0.0
    %854 = vmatpush.msra.mxu0 0.0
    %855 = vmatpush.msra.mxu0 0.0
    %856 = vmatpush.msra.mxu0 0.0
    %857 = vmatpush.msra.mxu0 0.0
    %858 = vmatpush.msra.mxu0 0.0
    %859 = vmatpush.msra.mxu0 0.0
    %860 = vmatpush.msra.mxu0 0.0
    %861 = vmatpush.msra.mxu0 0.0
    %862 = vmatpush.msra.mxu0 0.0
    %863 = vmatpush.msra.mxu0 0.0
    %864 = vmatpush.msra.mxu0 0.0
    %865 = vmatpush.msra.mxu0 %v25
    %866 = vmatpush.msra.mxu0 %v24
    %867 = vmatpush.msra.mxu0 %v23
    %868 = vmatpush.msra.mxu0 %v22
    %869 = vmatmul.f32.gmra.mxu0 %v851
    %v870 = vpop.f32.mrf.mxu0
    %v871 = vadd.f32 0.0, %v870
    %872 = vdwg.mxu0
    %v873 = vadd.f32 %v850, %v871
    %v874 = vxor.u32 %v873, 2147483648
    %v875 = vmul.f32 %v874, 1.442695
    %v876 = vpow.pop %v875
    %v877 = vadd.f32 %v876, 1.0
    %v878 = vrcp.pop %v877
    %v879 = vmul.f32 %v877, %v878
    %v880 = vsub.f32 1.0, %v879
    %v881 = vmul.f32 %v878, %v880
    %v882 = vadd.f32 %v878, %v881
    %vm883 = vweird.f32 %v877
    %vm884 = vweird.f32 %v878
    %vm885 = vmor %vm883, %vm884
    %v886 = vsel %vm885, %v878, %v882
    %v887 = vand.u32 2147483647, %v877
    %vm888 = vcmp.eq.f32.partialorder %v887, 8.507059e+37
    %v889 = vand.u32 %v877, 2147483648
    %v890 = vor.u32 1.1754944e-38, %v889
    %v891 = vsel %vm888, %v890, %v886
    %v892 = vmul.f32 1.0, %v891
    %v893 = vtanh.pop %v873
    %v894 = vmul.f32 %v892, %v836
    %896 = vrot.lane.b32.xlu0 %v893, 64
    %v897 = vpop.permute.xlu0 %896
    %v899 = vmul.f32 %v892, %v897
    %901 = vrot.lane.b32.xlu0 %v899, 32
    %v902 = vpop.permute.xlu0 %901
    %v904 = vadd.f32 %v894, %v902
    %v905 = vtanh.pop %v904
    %907 = vrot.lane.b32.xlu0 %v905, 64
    %v908 = vpop.permute.xlu0 %907
    %v910 = vmul.f32 %v892, %v908
    %912 = vrot.lane.b32.xlu0 %v910, 32
    %v913 = vpop.permute.xlu0 %912
    %s915 = scalar_lea.vmem [#allocation2], 24
    %916 = vst.msk [vmem:[%s915] sm:$0x3] %vm99, %v913
    %s917 = scalar_lea.vmem %s0, 26
    %v918 = vld [vmem:[%s917] sm:$0x3]
    %v919 = vsel %vm29, %v913, 0
    %921 = vmatpush.msra.mxu0 0.0
    %922 = vmatpush.msra.mxu0 0.0
    %923 = vmatpush.msra.mxu0 0.0
    %924 = vmatpush.msra.mxu0 0.0
    %925 = vmatpush.msra.mxu0 0.0
    %926 = vmatpush.msra.mxu0 0.0
    %927 = vmatpush.msra.mxu0 0.0
    %928 = vmatpush.msra.mxu0 0.0
    %929 = vmatpush.msra.mxu0 0.0
    %930 = vmatpush.msra.mxu0 0.0
    %931 = vmatpush.msra.mxu0 0.0
    %932 = vmatpush.msra.mxu0 0.0
    %933 = vmatpush.msra.mxu0 %v25
    %934 = vmatpush.msra.mxu0 %v24
    %935 = vmatpush.msra.mxu0 %v23
    %936 = vmatpush.msra.mxu0 %v22
    %937 = vmatmul.f32.gmra.mxu0 %v919
    %v938 = vpop.f32.mrf.mxu0
    %v939 = vadd.f32 0.0, %v938
    %940 = vdwg.mxu0
    %v941 = vadd.f32 %v918, %v939
    %v942 = vxor.u32 %v941, 2147483648
    %v943 = vmul.f32 %v942, 1.442695
    %v944 = vpow.pop %v943
    %v945 = vadd.f32 %v944, 1.0
    %v946 = vrcp.pop %v945
    %v947 = vmul.f32 %v945, %v946
    %v948 = vsub.f32 1.0, %v947
    %v949 = vmul.f32 %v946, %v948
    %v950 = vadd.f32 %v946, %v949
    %vm951 = vweird.f32 %v945
    %vm952 = vweird.f32 %v946
    %vm953 = vmor %vm951, %vm952
    %v954 = vsel %vm953, %v946, %v950
    %v955 = vand.u32 2147483647, %v945
    %vm956 = vcmp.eq.f32.partialorder %v955, 8.507059e+37
    %v957 = vand.u32 %v945, 2147483648
    %v958 = vor.u32 1.1754944e-38, %v957
    %v959 = vsel %vm956, %v958, %v954
    %v960 = vmul.f32 1.0, %v959
    %v961 = vtanh.pop %v941
    %v962 = vmul.f32 %v960, %v904
    %964 = vrot.lane.b32.xlu0 %v961, 64
    %v965 = vpop.permute.xlu0 %964
    %v967 = vmul.f32 %v960, %v965
    %969 = vrot.lane.b32.xlu0 %v967, 32
    %v970 = vpop.permute.xlu0 %969
    %v972 = vadd.f32 %v962, %v970
    %v973 = vtanh.pop %v972
    %975 = vrot.lane.b32.xlu0 %v973, 64
    %v976 = vpop.permute.xlu0 %975
    %v978 = vmul.f32 %v960, %v976
    %980 = vrot.lane.b32.xlu0 %v978, 32
    %v981 = vpop.permute.xlu0 %980
    %s983 = scalar_lea.vmem [#allocation2], 26
    %984 = vst.msk [vmem:[%s983] sm:$0x3] %vm99, %v981
    %s985 = scalar_lea.vmem %s0, 28
    %v986 = vld [vmem:[%s985] sm:$0x3]
    %v987 = vsel %vm29, %v981, 0
    %989 = vmatpush.msra.mxu0 0.0
    %990 = vmatpush.msra.mxu0 0.0
    %991 = vmatpush.msra.mxu0 0.0
    %992 = vmatpush.msra.mxu0 0.0
    %993 = vmatpush.msra.mxu0 0.0
    %994 = vmatpush.msra.mxu0 0.0
    %995 = vmatpush.msra.mxu0 0.0
    %996 = vmatpush.msra.mxu0 0.0
    %997 = vmatpush.msra.mxu0 0.0
    %998 = vmatpush.msra.mxu0 0.0
    %999 = vmatpush.msra.mxu0 0.0
    %1000 = vmatpush.msra.mxu0 0.0
    %1001 = vmatpush.msra.mxu0 %v25
    %1002 = vmatpush.msra.mxu0 %v24
    %1003 = vmatpush.msra.mxu0 %v23
    %1004 = vmatpush.msra.mxu0 %v22
    %1005 = vmatmul.f32.gmra.mxu0 %v987
    %v1006 = vpop.f32.mrf.mxu0
    %v1007 = vadd.f32 0.0, %v1006
    %1008 = vdwg.mxu0
    %v1009 = vadd.f32 %v986, %v1007
    %v1010 = vxor.u32 %v1009, 2147483648
    %v1011 = vmul.f32 %v1010, 1.442695
    %v1012 = vpow.pop %v1011
    %v1013 = vadd.f32 %v1012, 1.0
    %v1014 = vrcp.pop %v1013
    %v1015 = vmul.f32 %v1013, %v1014
    %v1016 = vsub.f32 1.0, %v1015
    %v1017 = vmul.f32 %v1014, %v1016
    %v1018 = vadd.f32 %v1014, %v1017
    %vm1019 = vweird.f32 %v1013
    %vm1020 = vweird.f32 %v1014
    %vm1021 = vmor %vm1019, %vm1020
    %v1022 = vsel %vm1021, %v1014, %v1018
    %v1023 = vand.u32 2147483647, %v1013
    %vm1024 = vcmp.eq.f32.partialorder %v1023, 8.507059e+37
    %v1025 = vand.u32 %v1013, 2147483648
    %v1026 = vor.u32 1.1754944e-38, %v1025
    %v1027 = vsel %vm1024, %v1026, %v1022
    %v1028 = vmul.f32 1.0, %v1027
    %v1029 = vtanh.pop %v1009
    %v1030 = vmul.f32 %v1028, %v972
    %1032 = vrot.lane.b32.xlu0 %v1029, 64
    %v1033 = vpop.permute.xlu0 %1032
    %v1035 = vmul.f32 %v1028, %v1033
    %1037 = vrot.lane.b32.xlu0 %v1035, 32
    %v1038 = vpop.permute.xlu0 %1037
    %v1040 = vadd.f32 %v1030, %v1038
    %v1041 = vtanh.pop %v1040
    %1043 = vrot.lane.b32.xlu0 %v1041, 64
    %v1044 = vpop.permute.xlu0 %1043
    %v1046 = vmul.f32 %v1028, %v1044
    %1048 = vrot.lane.b32.xlu0 %v1046, 32
    %v1049 = vpop.permute.xlu0 %1048
    %s1051 = scalar_lea.vmem [#allocation2], 28
    %1052 = vst.msk [vmem:[%s1051] sm:$0x3] %vm99, %v1049
    %s1053 = scalar_lea.vmem %s0, 30
    %v1054 = vld [vmem:[%s1053] sm:$0x3]
    %v1055 = vsel %vm29, %v1049, 0
    %1057 = vmatpush.msra.mxu0 0.0
    %1058 = vmatpush.msra.mxu0 0.0
    %1059 = vmatpush.msra.mxu0 0.0
    %1060 = vmatpush.msra.mxu0 0.0
    %1061 = vmatpush.msra.mxu0 0.0
    %1062 = vmatpush.msra.mxu0 0.0
    %1063 = vmatpush.msra.mxu0 0.0
    %1064 = vmatpush.msra.mxu0 0.0
    %1065 = vmatpush.msra.mxu0 0.0
    %1066 = vmatpush.msra.mxu0 0.0
    %1067 = vmatpush.msra.mxu0 0.0
    %1068 = vmatpush.msra.mxu0 0.0
    %1069 = vmatpush.msra.mxu0 %v25
    %1070 = vmatpush.msra.mxu0 %v24
    %1071 = vmatpush.msra.mxu0 %v23
    %1072 = vmatpush.msra.mxu0 %v22
    %1073 = vmatmul.f32.gmra.mxu0 %v1055
    %v1074 = vpop.f32.mrf.mxu0
    %v1075 = vadd.f32 0.0, %v1074
    %1076 = vdwg.mxu0
    %v1077 = vadd.f32 %v1054, %v1075
    %v1078 = vxor.u32 %v1077, 2147483648
    %v1079 = vmul.f32 %v1078, 1.442695
    %v1080 = vpow.pop %v1079
    %v1081 = vadd.f32 %v1080, 1.0
    %v1082 = vrcp.pop %v1081
    %v1083 = vmul.f32 %v1081, %v1082
    %v1084 = vsub.f32 1.0, %v1083
    %v1085 = vmul.f32 %v1082, %v1084
    %v1086 = vadd.f32 %v1082, %v1085
    %vm1087 = vweird.f32 %v1081
    %vm1088 = vweird.f32 %v1082
    %vm1089 = vmor %vm1087, %vm1088
    %v1090 = vsel %vm1089, %v1082, %v1086
    %v1091 = vand.u32 2147483647, %v1081
    %vm1092 = vcmp.eq.f32.partialorder %v1091, 8.507059e+37
    %v1093 = vand.u32 %v1081, 2147483648
    %v1094 = vor.u32 1.1754944e-38, %v1093
    %v1095 = vsel %vm1092, %v1094, %v1090
    %v1096 = vmul.f32 1.0, %v1095
    %v1097 = vtanh.pop %v1077
    %v1098 = vmul.f32 %v1096, %v1040
    %1100 = vrot.lane.b32.xlu0 %v1097, 64
    %v1101 = vpop.permute.xlu0 %1100
    %v1103 = vmul.f32 %v1096, %v1101
    %1105 = vrot.lane.b32.xlu0 %v1103, 32
    %v1106 = vpop.permute.xlu0 %1105
    %v1108 = vadd.f32 %v1098, %v1106
    %v1109 = vtanh.pop %v1108
    %1111 = vrot.lane.b32.xlu0 %v1109, 64
    %v1112 = vpop.permute.xlu0 %1111
    %v1114 = vmul.f32 %v1096, %v1112
    %1116 = vrot.lane.b32.xlu0 %v1114, 32
    %v1117 = vpop.permute.xlu0 %1116
    %s1119 = scalar_lea.vmem [#allocation2], 30
    %1120 = vst.msk [vmem:[%s1119] sm:$0x3] %vm99, %v1117
    %1121 = vst.msk [vmem:[#allocation4] sm:$0x3] %vm99, %v1117
    %1123 = vrot.lane.b32.xlu0 %v1108, 96
    %v1124 = vpop.permute.xlu0 %1123
    %1126 = vst.msk [vmem:[#allocation6] sm:$0x3] %vm99, %v1124
    // Predicated region
    $region18: #{lstm_pallas.1} parent=1 // pred_check
      _
    $region19: #{lstm_pallas.1} parent=1 // pred_check_branch
      %1128 = sbr.rel (0) target = $region21
    $region20: #{lstm_pallas.1} parent=1 // pred_region
      %1130 = vsyncadd [#allocation3], 0
      %s1131 = sshll.u32 [#allocation2], 4
      %s1132 = int_to_ptr.vmem [resolvable:$true] %s1131
      %s1133 = sshll.u32 %s4, 4
      %s1134 = int_to_ptr.hbm [resolvable:$true] %s1133
      %1139 = dma.vmem_to_hbm [thread:$0]  %s1132, 512, %s1134, [#allocation3], 32, 32, 2
    $region21: #{lstm_pallas.1} parent=1 // pred_fallthru
      _
    // Predicated region
    $region22: #{lstm_pallas.1} parent=1 // pred_check
      _
    $region23: #{lstm_pallas.1} parent=1 // pred_check_branch
      %1141 = sbr.rel (0) target = $region25
    $region24: #{lstm_pallas.1} parent=1 // pred_region
      %1143 = vsyncadd [#allocation5], 0
      %s1145 = sshll.u32 [#allocation4], 4
      %s1146 = int_to_ptr.vmem [resolvable:$true] %s1145
      %s1147 = sshll.u32 %s5, 4
      %s1148 = int_to_ptr.hbm [resolvable:$true] %s1147
      %1150 = dma.vmem_to_hbm [thread:$0]  %s1146, 32, %s1148, [#allocation5]
    $region25: #{lstm_pallas.1} parent=1 // pred_fallthru
      _
    // Predicated region
    $region26: #{lstm_pallas.1} parent=1 // pred_check
      _
    $region27: #{lstm_pallas.1} parent=1 // pred_check_branch
      %1152 = sbr.rel (0) target = $region29
    $region28: #{lstm_pallas.1} parent=1 // pred_region
      %1154 = vsyncadd [#allocation5], 0
      %s1156 = sshll.u32 [#allocation6], 4
      %s1157 = int_to_ptr.vmem [resolvable:$true] %s1156
      %s1158 = sshll.u32 %s6, 4
      %s1159 = int_to_ptr.hbm [resolvable:$true] %s1158
      %1161 = dma.vmem_to_hbm [thread:$0]  %s1157, 32, %s1159, [#allocation5]
    $region29: #{lstm_pallas.1} parent=1 // pred_fallthru
      _
    // Predicated region
    $region30: #{lstm_pallas.1} parent=1 // pred_check
      _
    $region31: #{lstm_pallas.1} parent=1 // pred_check_branch
      %1163 = sbr.rel (0) target = $region33
    $region32: #{lstm_pallas.1} parent=1 // pred_region
      %1165 = dma.done [#allocation3], 512
    $region33: #{lstm_pallas.1} parent=1 // pred_fallthru
      _
    // Predicated region
    $region34: #{lstm_pallas.1} parent=1 // pred_check
      _
    $region35: #{lstm_pallas.1} parent=1 // pred_check_branch
      %1167 = sbr.rel (0) target = $region37
    $region36: #{lstm_pallas.1} parent=1 // pred_region
      %1169 = dma.done [#allocation5], 32
    $region37: #{lstm_pallas.1} parent=1 // pred_fallthru
      _
    // Predicated region
    $region38: #{lstm_pallas.1} parent=1 // pred_check
      _
    $region39: #{lstm_pallas.1} parent=1 // pred_check_branch
      %1171 = sbr.rel (0) target = $region41
    $region40: #{lstm_pallas.1} parent=1 // pred_region
      %1173 = dma.done [#allocation5], 32
    $region41: #{lstm_pallas.1} parent=1 // pred_fallthru
      _
    %1174 = vsyncpa [#allocation3], 1
    %1175 = vsyncpa [#allocation5], 1

</llo_original>
